<compile_context>
chip_gen: v5e
topology: v5e:2x2
jax: 0.10.0
libtpu: 0.0.40
codegen_flags: <defaults>
</compile_context>

<pallas_src>
import numpy as np
import jax
import jax.numpy as jnp
from jax import lax
from jax.experimental import pallas as pl
from jax.experimental.pallas import tpu as pltpu

K = 4        # ConvTranspose2d kernel_size
STRIDE = 2   # stride
PAD = 1      # padding
EPS = 1e-4   # StudioGAN batchnorm_2d eps


def _round_up(x, m):
    return -(-x // m) * m


def _vmem_budget_bytes():
    """~75% of this chip's per-core VMEM; falls back to the smallest (v7x, 64 MiB)."""
    try:
        cap = getattr(pltpu.get_tpu_info(), "vmem_capacity_bytes", None)
        if cap:
            return int(0.75 * cap)
    except Exception:
        pass
    return int(0.75 * (64 * 2 ** 20))


# -----------------------------------------------------------------------------
# Pass 1: tiled deconv matmul (bf16 MXU, f32 acc) + one-pass BN statistics.
# -----------------------------------------------------------------------------
def _conv_stats_kernel(p_ref, w_ref, y_ref, stats_ref):
    # p_ref:     (tile_m, Kp)      bf16  patch tile
    # w_ref:     (Kp, tile_n)      bf16  combined phase-weight tile (resident over m)
    # y_ref:     (tile_m, tile_n)  bf16  raw deconv tile (bf16 store: half the HBM bytes)
    # stats_ref: (2, tile_n)       f32   rows [sum, sum_sq]; resident accumulator over m
    acc = jnp.dot(p_ref[...], w_ref[...], preferred_element_type=jnp.float32)
    y_ref[...] = acc.astype(y_ref.dtype)

    @pl.when(pl.program_id(1) == 0)
    def _():
        stats_ref[...] = jnp.zeros_like(stats_ref)

    # Two row-slice updates (no sublane concat relayout).  At tiny Kp (=128, e.g. the
    # test shape) these VPU reductions rival the MXU time; they drop <10% once 9*Ci>=128.
    stats_ref[0:1, :] += jnp.sum(acc, axis=0, keepdims=True)
    stats_ref[1:2, :] += jnp.sum(acc * acc, axis=0, keepdims=True)


# -----------------------------------------------------------------------------
# Pass 2: fused BN affine + ReLU + cast (one read, one write per tile).
# -----------------------------------------------------------------------------
def _bn_relu_kernel(y_ref, scale_ref, shift_ref, o_ref):
    y = y_ref[...].astype(jnp.float32)
    o_ref[...] = jnp.maximum(y * scale_ref[...] + shift_ref[...],
                             0.0).astype(o_ref.dtype)


def gen_block_forward(x_nchw, weight, bias, gamma, beta, label=None, *,
                      tile_m=512, single_buffer_weights=True):
    """GenBlock forward.  x_nchw: [N,Ci,H,W]; weight: [Ci,Co,4,4] (ConvTranspose2d
    layout); bias/gamma/beta: [Co].  `label` accepted for API parity, ignored
    (conditional_bn=False).  Deconv bias is cancelled exactly by the train-mode BN
    mean subtraction, so it never enters the kernels.  Returns [N,Co,2H,2W]."""
    del label, bias
    N, Ci, H, W = x_nchw.shape
    Co = weight.shape[1]
    Ho, Wo = STRIDE * H, STRIDE * W
    M = N * H * W
    out_dtype = x_nchw.dtype

    tile_m = max(8, min(_round_up(int(tile_m), 8), _round_up(M, 8)))
    Mp = _round_up(M, tile_m)
    Kd = 9 * Ci
    Kp = _round_up(Kd, 128)
    # Phases packed contiguously on lanes: column p*Co + co with p = 2*a + b; only the
    # packed total (4*Co) is padded to a lane multiple.
    C4 = _round_up(4 * Co, 128)

    # tile_n: a 128-multiple dividing C4; prefer >=2 tiles (v7x megacore 'parallel'
    # axis) and cap at 512 to bound the resident weight block.
    q = C4 // 128
    limit = q if q < 2 else q // 2
    dn = max(d for d in range(1, min(4, limit) + 1) if q % d == 0)
    tile_n = 128 * dn
    n_tiles_c = C4 // tile_n
    n_tiles_m = Mp // tile_m

    # ---- wrapper glue: NCHW -> NHWC (bf16), pad 1, build 3x3-offset patches ------
    # TODO(synk): this im2col duplicates the input 9x in HBM; cut to 3x (row shifts
    # only, dw handled in-kernel on a halo'd block) or gather straight from the padded
    # image with a manual-DMA pipeline when Ci is large.
    x = jnp.transpose(x_nchw, (0, 2, 3, 1)).astype(jnp.bfloat16)        # [N,H,W,Ci]
    xp = jnp.pad(x, ((0, 0), (1, 1), (1, 1), (0, 0)))                   # [N,H+2,W+2,Ci]
    parts = [xp[:, dh:dh + H, dw:dw + W, :] for dh in range(3) for dw in range(3)]
    patches = jnp.concatenate(parts, axis=-1).reshape(M, Kd)            # [M, 9*Ci]
    patches = jnp.pad(patches, ((0, Mp - M), (0, Kp - Kd)))

    # ---- combined phase weight: Wc[(dh*3+dw)*Ci + ci, p*Co + co] -----------------
    # Output phase (a,b) at (2h+a, 2w+b) reads padded-input offset (dh,dw) with deconv
    # tap (kh,kw) = (a + 3 - 2*dh, b + 3 - 2*dw) whenever that tap is in [0, 4).
    wc = jnp.zeros((Kp, C4), jnp.float32)
    for dh in range(3):
        for dw in range(3):
            o = dh * 3 + dw
            for a in range(2):
                kh = a + 3 - 2 * dh
                if not 0 <= kh < K:
                    continue
                for b in range(2):
                    kw = b + 3 - 2 * dw
                    if not 0 <= kw < K:
                        continue
                    p = 2 * a + b
                    wc = wc.at[o * Ci:(o + 1) * Ci,
                               p * Co:(p + 1) * Co].set(weight[:, :, kh, kw])
    wc = wc.astype(jnp.bfloat16)

    vmem_budget = _vmem_budget_bytes()

    # Resident (over the m axis) weight tile: single-buffer it when supported.
    if single_buffer_weights:
        w_spec = pl.BlockSpec((Kp, tile_n), lambda n, m: (0, n),
                              pipeline_mode=pl.Buffered(1))
        w_bufs = 1
    else:
        w_spec = pl.BlockSpec((Kp, tile_n), lambda n, m: (0, n))
        w_bufs = 2

    # ---- pass 1: deconv matmul tiles + BN sum / sum-of-squares -------------------
    need1 = (2 * tile_m * Kp * 2 + w_bufs * Kp * tile_n * 2
             + 2 * tile_m * tile_n * 2 + 2 * 2 * tile_n * 4)
    vmem1 = int(min(vmem_budget, max(2 * need1, 32 << 20)))
    conv_out, stats = pl.pallas_call(
        _conv_stats_kernel,
        grid=(n_tiles_c, n_tiles_m),
        in_specs=[
            pl.BlockSpec((tile_m, Kp), lambda n, m: (m, 0)),
            w_spec,
        ],
        out_specs=(
            pl.BlockSpec((tile_m, tile_n), lambda n, m: (m, n)),
            pl.BlockSpec((2, tile_n), lambda n, m: (0, n)),     # resident accumulator
        ),
        out_shape=(
            jax.ShapeDtypeStruct((Mp, C4), jnp.bfloat16),       # bf16 intermediate
            jax.ShapeDtypeStruct((2, C4), jnp.float32),
        ),
        compiler_params=pltpu.CompilerParams(
            # stats are revisited across the M axis -> 'arbitrary'; the C4-tile axis is
            # independent -> 'parallel' (v7x megacore split).
            dimension_semantics=("parallel", "arbitrary"),
            vmem_limit_bytes=vmem1,
        ),
        cost_estimate=pl.CostEstimate(
            flops=2 * Mp * Kp * C4 + 3 * Mp * C4,
            transcendentals=0,
            bytes_accessed=(n_tiles_c * Mp * Kp * 2 + Kp * C4 * 2
                            + Mp * C4 * 2 + 2 * C4 * 4),
        ),
    )(patches, wc)

    # ---- tiny glue: fold the 4 phases into per-channel BN scale/shift ------------
    # NOTE: E[x^2]-E[x]^2 with sequential f32 accumulation; clamp at 0 against
    # cancellation.  For production batch/resolution use chunked partial sums.
    count = jnp.float32(N * Ho * Wo)                            # = 4 * M
    sum_c = jnp.sum(stats[0, :4 * Co].reshape(4, Co), axis=0)
    sq_c = jnp.sum(stats[1, :4 * Co].reshape(4, Co), axis=0)
    mean = sum_c / count
    var = jnp.maximum(sq_c / count - mean * mean, 0.0)
    scale_c = gamma.astype(jnp.float32) * lax.rsqrt(var + EPS)
    shift_c = beta.astype(jnp.float32) - mean * scale_c
    scale4 = jnp.zeros((C4,), jnp.float32).at[:4 * Co].set(
        jnp.tile(scale_c, 4)).reshape(1, C4)
    shift4 = jnp.zeros((C4,), jnp.float32).at[:4 * Co].set(
        jnp.tile(shift_c, 4)).reshape(1, C4)

    # ---- pass 2: fused normalize + affine + ReLU + cast --------------------------
    tile_m2 = tile_m * 2 if Mp % (tile_m * 2) == 0 else tile_m
    out_bytes = np.dtype(out_dtype).itemsize
    need2 = 2 * tile_m2 * C4 * 2 + 2 * tile_m2 * C4 * out_bytes + 4 * C4 * 4
    vmem2 = int(min(vmem_budget, max(2 * need2, 32 << 20)))
    out_flat = pl.pallas_call(
        _bn_relu_kernel,
        grid=(Mp // tile_m2,),
        in_specs=[
            pl.BlockSpec((tile_m2, C4), lambda i: (i, 0)),
            pl.BlockSpec((1, C4), lambda i: (0, 0)),
            pl.BlockSpec((1, C4), lambda i: (0, 0)),
        ],
        out_specs=pl.BlockSpec((tile_m2, C4), lambda i: (i, 0)),
        out_shape=jax.ShapeDtypeStruct((Mp, C4), out_dtype),
        compiler_params=pltpu.CompilerParams(
            dimension_semantics=("parallel",),
            vmem_limit_bytes=vmem2,
        ),
        cost_estimate=pl.CostEstimate(
            flops=3 * Mp * C4, transcendentals=0,
            bytes_accessed=Mp * C4 * (2 + out_bytes) + 2 * C4 * 4,
        ),
    )(conv_out, scale4, shift4)

    # ---- epilogue: ONE fused transpose (phase de-interleave + NHWC->NCHW) --------
    # TODO(synk): drop this transpose (return NHWC) if the consumer is channels-last,
    # or fold the phase interleave into pass 2 with an (n, h)-gridded out_spec.
    y = out_flat[:M, :4 * Co].reshape(N, H, W, 2, 2, Co)        # (n,h,w,a,b,co)
    return jnp.transpose(y, (0, 5, 1, 3, 2, 4)).reshape(N, Co, Ho, Wo)


def reference_forward(x, weight, bias, gamma, beta):
    """Independent jax.lax reference of ConvTranspose2d + BN(train) + ReLU."""
    # conv_transpose(x, W, s=2, p=1) == conv(dilate(x,2), flip(W), pad=2)
    w_conv = jnp.transpose(jnp.flip(weight, axis=(2, 3)), (1, 0, 2, 3))  # OIHW
    dc = lax.conv_general_dilated(
        x, w_conv, window_strides=(1, 1), padding=((2, 2), (2, 2)),
        lhs_dilation=(2, 2), dimension_numbers=('NCHW', 'OIHW', 'NCHW'),
        precision=lax.Precision.HIGHEST)
    dc = dc + bias[None, :, None, None]
    mu = dc.mean(axis=(0, 2, 3), keepdims=True)
    var = ((dc - mu) ** 2).mean(axis=(0, 2, 3), keepdims=True)
    y = (dc - mu) * lax.rsqrt(var + EPS)
    y = y * gamma[None, :, None, None] + beta[None, :, None, None]
    return jnp.maximum(y, 0.0)


if __name__ == "__main__":
    # TODO(synk): spectral-norm and ConditionalBatchNorm2d branches of GenBlock are
    # config switches not exercised here (plain deconv + BatchNorm2d + ReLU path);
    # running_mean/running_var buffer updates of training BN are also not emitted.
    N, Ci, Co, H, W = 2, 4, 8, 16, 16
    num_classes = 10

    key = jax.random.PRNGKey(0)
    kx, kw, kb, kg, kbt, kl = jax.random.split(key, 6)
    # Round-trip x / weight through bf16 so the f32 reference and the bf16-MXU kernel
    # see identical operand values.
    x = jax.random.normal(kx, (N, Ci, H, W), jnp.float32)
    x = x.astype(jnp.bfloat16).astype(jnp.float32)
    weight = 0.1 * jax.random.normal(kw, (Ci, Co, K, K), jnp.float32)
    weight = weight.astype(jnp.bfloat16).astype(jnp.float32)
    bias = 0.1 * jax.random.normal(kb, (Co,), jnp.float32)
    gamma = 1.0 + 0.1 * jax.random.normal(kg, (Co,), jnp.float32)
    beta = 0.1 * jax.random.normal(kbt, (Co,), jnp.float32)
    label = jax.random.randint(kl, (N,), 0, num_classes)   # unused (no conditional BN)

    fwd = jax.jit(gen_block_forward,
                  static_argnames=("tile_m", "single_buffer_weights"))
    try:
        out = jax.block_until_ready(fwd(x, weight, bias, gamma, beta, label))
    except Exception:
        # Fallback for JAX builds that reject pl.Buffered(1) on a pallas_call BlockSpec.
        out = jax.block_until_ready(
            fwd(x, weight, bias, gamma, beta, label, single_buffer_weights=False))

    ref = jax.block_until_ready(reference_forward(x, weight, bias, gamma, beta))
    assert out.shape == (N, Co, STRIDE * H, STRIDE * W), out.shape
    err = np.max(np.abs(np.asarray(out) - np.asarray(ref)))
    # bf16 pass-1 intermediate => ~2^-9 relative error on pre-BN activations, so the
    # tolerance is looser than a pure-f32 pipeline; real bugs produce O(1) errors.
    assert np.allclose(np.asarray(out), np.asarray(ref), atol=3e-2, rtol=3e-2), (
        f"mismatch vs reference: max abs err {err}")

    print("KERNEL_OK")
</pallas_src>

<mosaic_0001>
module attributes {stable_mosaic.version = 11 : i64} {
  func.func @_conv_stats_kernel(%arg0: i32, %arg1: i32, %arg2: memref<512x128xbf16, #tpu.memory_space<vmem>>, %arg3: memref<128x128xbf16, #tpu.memory_space<vmem>>, %arg4: memref<512x128xbf16, #tpu.memory_space<vmem>>, %arg5: memref<2x128xf32, #tpu.memory_space<vmem>>) attributes {dimension_semantics = [#tpu.dimension_semantics<parallel>, #tpu.dimension_semantics<arbitrary>], iteration_bounds = array<i64: 1, 1>, scalar_prefetch = 0 : i64, scratch_operands = 0 : i64, tpu.core_type = #tpu.core_type<tc>, window_params = [{transform_indices = @transform_0, window_bounds = array<i64: 512, 128>}, {pipeline_mode = #tpu.pipeline_mode<synchronous>, transform_indices = @transform_1, window_bounds = array<i64: 128, 128>}, {transform_indices = @transform_2, window_bounds = array<i64: 512, 128>}, {transform_indices = @transform_3, window_bounds = array<i64: 2, 128>}]} {
    %c0 = arith.constant 0 : index
    %c0_0 = arith.constant 0 : index
    %0 = vector.load %arg2[%c0, %c0_0] : memref<512x128xbf16, #tpu.memory_space<vmem>>, vector<512x128xbf16>
    %c0_1 = arith.constant 0 : index
    %c0_2 = arith.constant 0 : index
    %1 = vector.load %arg3[%c0_1, %c0_2] : memref<128x128xbf16, #tpu.memory_space<vmem>>, vector<128x128xbf16>
    %cst = arith.constant dense<0.000000e+00> : vector<512x128xf32>
    %2 = tpu.matmul %0, %1, %cst {dimension_numbers = #tpu.dot_dimension_numbers<[1], [0], [0], [1], [0, 0, 1, 1], [], []>} : vector<512x128xbf16>, vector<128x128xbf16>, vector<512x128xf32> -> vector<512x128xf32>
    %3 = arith.truncf %2 : vector<512x128xf32> to vector<512x128xbf16>
    %c0_3 = arith.constant 0 : index
    %c0_4 = arith.constant 0 : index
    %4 = vector.load %arg4[%c0_3, %c0_4] : memref<512x128xbf16, #tpu.memory_space<vmem>>, vector<512x128xbf16>
    tpu.vector_store %arg4[%c0_3, %c0_4], %3 {strides = array<i32>} : memref<512x128xbf16, #tpu.memory_space<vmem>>, vector<512x128xbf16>,
    %c0_i32 = arith.constant 0 : i32
    %5 = arith.cmpi eq, %arg1, %c0_i32 : i32
    %6 = arith.extui %5 : i1 to i32
    %c0_i32_5 = arith.constant 0 : i32
    %7 = arith.cmpi ne, %6, %c0_i32_5 : i32
    scf.if %7 {
      %cst_15 = arith.constant 0.000000e+00 : f32
      %19 = vector.broadcast %cst_15 : f32 to vector<2x128xf32>
      %c0_16 = arith.constant 0 : index
      %c0_17 = arith.constant 0 : index
      %20 = vector.load %arg5[%c0_16, %c0_17] : memref<2x128xf32, #tpu.memory_space<vmem>>, vector<2x128xf32>
      tpu.vector_store %arg5[%c0_16, %c0_17], %19 {strides = array<i32>} : memref<2x128xf32, #tpu.memory_space<vmem>>, vector<2x128xf32>,
    } else {
    }
    %c0_6 = arith.constant 0 : index
    %c0_7 = arith.constant 0 : index
    %8 = vector.load %arg5[%c0_6, %c0_7] : memref<2x128xf32, #tpu.memory_space<vmem>>, vector<1x128xf32>
    %cst_8 = arith.constant dense<0.000000e+00> : vector<128xf32>
    %9 = vector.multi_reduction <add>, %2, %cst_8 [0] : vector<512x128xf32> to vector<128xf32>
    %10 = vector.shape_cast %9 : vector<128xf32> to vector<1x128xf32>
    %11 = arith.addf %8, %10 : vector<1x128xf32>
    %c0_9 = arith.constant 0 : index
    %c0_10 = arith.constant 0 : index
    %12 = vector.load %arg5[%c0_9, %c0_10] : memref<2x128xf32, #tpu.memory_space<vmem>>, vector<1x128xf32>
    tpu.vector_store %arg5[%c0_9, %c0_10], %11 {strides = array<i32>} : memref<2x128xf32, #tpu.memory_space<vmem>>, vector<1x128xf32>,
    %c1 = arith.constant 1 : index
    %c0_11 = arith.constant 0 : index
    %13 = vector.load %arg5[%c1, %c0_11] : memref<2x128xf32, #tpu.memory_space<vmem>>, vector<1x128xf32>
    %14 = arith.mulf %2, %2 : vector<512x128xf32>
    %cst_12 = arith.constant dense<0.000000e+00> : vector<128xf32>
    %15 = vector.multi_reduction <add>, %14, %cst_12 [0] : vector<512x128xf32> to vector<128xf32>
    %16 = vector.shape_cast %15 : vector<128xf32> to vector<1x128xf32>
    %17 = arith.addf %13, %16 : vector<1x128xf32>
    %c1_13 = arith.constant 1 : index
    %c0_14 = arith.constant 0 : index
    %18 = vector.load %arg5[%c1_13, %c0_14] : memref<2x128xf32, #tpu.memory_space<vmem>>, vector<1x128xf32>
    tpu.vector_store %arg5[%c1_13, %c0_14], %17 {strides = array<i32>} : memref<2x128xf32, #tpu.memory_space<vmem>>, vector<1x128xf32>,
    return
  }
  func.func @transform_0(%arg0: i32, %arg1: i32) -> (i32, i32) {
    %c0_i32 = arith.constant 0 : i32
    %c0_i32_0 = arith.constant 0 : i32
    return %arg1, %c0_i32 : i32, i32
  }
  func.func @transform_1(%arg0: i32, %arg1: i32) -> (i32, i32) {
    %c0_i32 = arith.constant 0 : i32
    %c0_i32_0 = arith.constant 0 : i32
    return %c0_i32, %arg0 : i32, i32
  }
  func.func @transform_2(%arg0: i32, %arg1: i32) -> (i32, i32) {
    %c0_i32 = arith.constant 0 : i32
    return %arg1, %arg0 : i32, i32
  }
  func.func @transform_3(%arg0: i32, %arg1: i32) -> (i32, i32) {
    %c0_i32 = arith.constant 0 : i32
    %c0_i32_0 = arith.constant 0 : i32
    return %c0_i32, %arg0 : i32, i32
  }
}

module attributes {stable_mosaic.version = 11 : i64} {
  func.func @_bn_relu_kernel(%arg0: i32, %arg1: memref<512x128xbf16, #tpu.memory_space<vmem>>, %arg2: memref<1x128xf32, #tpu.memory_space<vmem>>, %arg3: memref<1x128xf32, #tpu.memory_space<vmem>>, %arg4: memref<512x128xf32, #tpu.memory_space<vmem>>) attributes {dimension_semantics = [#tpu.dimension_semantics<parallel>], iteration_bounds = array<i64: 1>, scalar_prefetch = 0 : i64, scratch_operands = 0 : i64, tpu.core_type = #tpu.core_type<tc>, window_params = [{transform_indices = @transform_0, window_bounds = array<i64: 512, 128>}, {pipeline_mode = #tpu.pipeline_mode<synchronous>, transform_indices = @transform_1, window_bounds = array<i64: 1, 128>}, {pipeline_mode = #tpu.pipeline_mode<synchronous>, transform_indices = @transform_2, window_bounds = array<i64: 1, 128>}, {transform_indices = @transform_3, window_bounds = array<i64: 512, 128>}]} {
    %c0 = arith.constant 0 : index
    %c0_0 = arith.constant 0 : index
    %0 = vector.load %arg1[%c0, %c0_0] : memref<512x128xbf16, #tpu.memory_space<vmem>>, vector<512x128xbf16>
    %1 = arith.extf %0 : vector<512x128xbf16> to vector<512x128xf32>
    %c0_1 = arith.constant 0 : index
    %c0_2 = arith.constant 0 : index
    %2 = vector.load %arg2[%c0_1, %c0_2] : memref<1x128xf32, #tpu.memory_space<vmem>>, vector<1x128xf32>
    %3 = vector.broadcast %2 : vector<1x128xf32> to vector<512x128xf32>
    %4 = arith.mulf %1, %3 : vector<512x128xf32>
    %c0_3 = arith.constant 0 : index
    %c0_4 = arith.constant 0 : index
    %5 = vector.load %arg3[%c0_3, %c0_4] : memref<1x128xf32, #tpu.memory_space<vmem>>, vector<1x128xf32>
    %6 = vector.broadcast %5 : vector<1x128xf32> to vector<512x128xf32>
    %7 = arith.addf %4, %6 : vector<512x128xf32>
    %cst = arith.constant 0.000000e+00 : f32
    %8 = vector.broadcast %cst : f32 to vector<512x128xf32>
    %9 = arith.maximumf %7, %8 : vector<512x128xf32>
    %c0_5 = arith.constant 0 : index
    %c0_6 = arith.constant 0 : index
    %10 = vector.load %arg4[%c0_5, %c0_6] : memref<512x128xf32, #tpu.memory_space<vmem>>, vector<512x128xf32>
    tpu.vector_store %arg4[%c0_5, %c0_6], %9 {strides = array<i32>} : memref<512x128xf32, #tpu.memory_space<vmem>>, vector<512x128xf32>,
    return
  }
  func.func @transform_0(%arg0: i32) -> (i32, i32) {
    %c0_i32 = arith.constant 0 : i32
    %c0_i32_0 = arith.constant 0 : i32
    return %arg0, %c0_i32 : i32, i32
  }
  func.func @transform_1(%arg0: i32) -> (i32, i32) {
    %c0_i32 = arith.constant 0 : i32
    %c0_i32_0 = arith.constant 0 : i32
    %c0_i32_1 = arith.constant 0 : i32
    return %c0_i32, %c0_i32_0 : i32, i32
  }
  func.func @transform_2(%arg0: i32) -> (i32, i32) {
    %c0_i32 = arith.constant 0 : i32
    %c0_i32_0 = arith.constant 0 : i32
    %c0_i32_1 = arith.constant 0 : i32
    return %c0_i32, %c0_i32_0 : i32, i32
  }
  func.func @transform_3(%arg0: i32) -> (i32, i32) {
    %c0_i32 = arith.constant 0 : i32
    %c0_i32_0 = arith.constant 0 : i32
    return %arg0, %c0_i32 : i32, i32
  }
}

module attributes {stable_mosaic.version = 11 : i64} {
  func.func @_conv_stats_kernel(%arg0: i32, %arg1: i32, %arg2: memref<512x128xbf16, #tpu.memory_space<vmem>>, %arg3: memref<128x128xbf16, #tpu.memory_space<vmem>>, %arg4: memref<512x128xbf16, #tpu.memory_space<vmem>>, %arg5: memref<2x128xf32, #tpu.memory_space<vmem>>) attributes {dimension_semantics = [#tpu.dimension_semantics<parallel>, #tpu.dimension_semantics<arbitrary>], iteration_bounds = array<i64: 1, 1>, scalar_prefetch = 0 : i64, scratch_operands = 0 : i64, tpu.core_type = #tpu.core_type<tc>, window_params = [{transform_indices = @transform_0, window_bounds = array<i64: 512, 128>}, {transform_indices = @transform_1, window_bounds = array<i64: 128, 128>}, {transform_indices = @transform_2, window_bounds = array<i64: 512, 128>}, {transform_indices = @transform_3, window_bounds = array<i64: 2, 128>}]} {
    %c0 = arith.constant 0 : index
    %c0_0 = arith.constant 0 : index
    %0 = vector.load %arg2[%c0, %c0_0] : memref<512x128xbf16, #tpu.memory_space<vmem>>, vector<512x128xbf16>
    %c0_1 = arith.constant 0 : index
    %c0_2 = arith.constant 0 : index
    %1 = vector.load %arg3[%c0_1, %c0_2] : memref<128x128xbf16, #tpu.memory_space<vmem>>, vector<128x128xbf16>
    %cst = arith.constant dense<0.000000e+00> : vector<512x128xf32>
    %2 = tpu.matmul %0, %1, %cst {dimension_numbers = #tpu.dot_dimension_numbers<[1], [0], [0], [1], [0, 0, 1, 1], [], []>} : vector<512x128xbf16>, vector<128x128xbf16>, vector<512x128xf32> -> vector<512x128xf32>
    %3 = arith.truncf %2 : vector<512x128xf32> to vector<512x128xbf16>
    %c0_3 = arith.constant 0 : index
    %c0_4 = arith.constant 0 : index
    %4 = vector.load %arg4[%c0_3, %c0_4] : memref<512x128xbf16, #tpu.memory_space<vmem>>, vector<512x128xbf16>
    tpu.vector_store %arg4[%c0_3, %c0_4], %3 {strides = array<i32>} : memref<512x128xbf16, #tpu.memory_space<vmem>>, vector<512x128xbf16>,
    %c0_i32 = arith.constant 0 : i32
    %5 = arith.cmpi eq, %arg1, %c0_i32 : i32
    %6 = arith.extui %5 : i1 to i32
    %c0_i32_5 = arith.constant 0 : i32
    %7 = arith.cmpi ne, %6, %c0_i32_5 : i32
    scf.if %7 {
      %cst_15 = arith.constant 0.000000e+00 : f32
      %19 = vector.broadcast %cst_15 : f32 to vector<2x128xf32>
      %c0_16 = arith.constant 0 : index
      %c0_17 = arith.constant 0 : index
      %20 = vector.load %arg5[%c0_16, %c0_17] : memref<2x128xf32, #tpu.memory_space<vmem>>, vector<2x128xf32>
      tpu.vector_store %arg5[%c0_16, %c0_17], %19 {strides = array<i32>} : memref<2x128xf32, #tpu.memory_space<vmem>>, vector<2x128xf32>,
    } else {
    }
    %c0_6 = arith.constant 0 : index
    %c0_7 = arith.constant 0 : index
    %8 = vector.load %arg5[%c0_6, %c0_7] : memref<2x128xf32, #tpu.memory_space<vmem>>, vector<1x128xf32>
    %cst_8 = arith.constant dense<0.000000e+00> : vector<128xf32>
    %9 = vector.multi_reduction <add>, %2, %cst_8 [0] : vector<512x128xf32> to vector<128xf32>
    %10 = vector.shape_cast %9 : vector<128xf32> to vector<1x128xf32>
    %11 = arith.addf %8, %10 : vector<1x128xf32>
    %c0_9 = arith.constant 0 : index
    %c0_10 = arith.constant 0 : index
    %12 = vector.load %arg5[%c0_9, %c0_10] : memref<2x128xf32, #tpu.memory_space<vmem>>, vector<1x128xf32>
    tpu.vector_store %arg5[%c0_9, %c0_10], %11 {strides = array<i32>} : memref<2x128xf32, #tpu.memory_space<vmem>>, vector<1x128xf32>,
    %c1 = arith.constant 1 : index
    %c0_11 = arith.constant 0 : index
    %13 = vector.load %arg5[%c1, %c0_11] : memref<2x128xf32, #tpu.memory_space<vmem>>, vector<1x128xf32>
    %14 = arith.mulf %2, %2 : vector<512x128xf32>
    %cst_12 = arith.constant dense<0.000000e+00> : vector<128xf32>
    %15 = vector.multi_reduction <add>, %14, %cst_12 [0] : vector<512x128xf32> to vector<128xf32>
    %16 = vector.shape_cast %15 : vector<128xf32> to vector<1x128xf32>
    %17 = arith.addf %13, %16 : vector<1x128xf32>
    %c1_13 = arith.constant 1 : index
    %c0_14 = arith.constant 0 : index
    %18 = vector.load %arg5[%c1_13, %c0_14] : memref<2x128xf32, #tpu.memory_space<vmem>>, vector<1x128xf32>
    tpu.vector_store %arg5[%c1_13, %c0_14], %17 {strides = array<i32>} : memref<2x128xf32, #tpu.memory_space<vmem>>, vector<1x128xf32>,
    return
  }
  func.func @transform_0(%arg0: i32, %arg1: i32) -> (i32, i32) {
    %c0_i32 = arith.constant 0 : i32
    %c0_i32_0 = arith.constant 0 : i32
    return %arg1, %c0_i32 : i32, i32
  }
  func.func @transform_1(%arg0: i32, %arg1: i32) -> (i32, i32) {
    %c0_i32 = arith.constant 0 : i32
    %c0_i32_0 = arith.constant 0 : i32
    return %c0_i32, %arg0 : i32, i32
  }
  func.func @transform_2(%arg0: i32, %arg1: i32) -> (i32, i32) {
    %c0_i32 = arith.constant 0 : i32
    return %arg1, %arg0 : i32, i32
  }
  func.func @transform_3(%arg0: i32, %arg1: i32) -> (i32, i32) {
    %c0_i32 = arith.constant 0 : i32
    %c0_i32_0 = arith.constant 0 : i32
    return %c0_i32, %arg0 : i32, i32
  }
}

module attributes {stable_mosaic.version = 11 : i64} {
  func.func @_bn_relu_kernel(%arg0: i32, %arg1: memref<512x128xbf16, #tpu.memory_space<vmem>>, %arg2: memref<1x128xf32, #tpu.memory_space<vmem>>, %arg3: memref<1x128xf32, #tpu.memory_space<vmem>>, %arg4: memref<512x128xf32, #tpu.memory_space<vmem>>) attributes {dimension_semantics = [#tpu.dimension_semantics<parallel>], iteration_bounds = array<i64: 1>, scalar_prefetch = 0 : i64, scratch_operands = 0 : i64, tpu.core_type = #tpu.core_type<tc>, window_params = [{transform_indices = @transform_0, window_bounds = array<i64: 512, 128>}, {pipeline_mode = #tpu.pipeline_mode<synchronous>, transform_indices = @transform_1, window_bounds = array<i64: 1, 128>}, {pipeline_mode = #tpu.pipeline_mode<synchronous>, transform_indices = @transform_2, window_bounds = array<i64: 1, 128>}, {transform_indices = @transform_3, window_bounds = array<i64: 512, 128>}]} {
    %c0 = arith.constant 0 : index
    %c0_0 = arith.constant 0 : index
    %0 = vector.load %arg1[%c0, %c0_0] : memref<512x128xbf16, #tpu.memory_space<vmem>>, vector<512x128xbf16>
    %1 = arith.extf %0 : vector<512x128xbf16> to vector<512x128xf32>
    %c0_1 = arith.constant 0 : index
    %c0_2 = arith.constant 0 : index
    %2 = vector.load %arg2[%c0_1, %c0_2] : memref<1x128xf32, #tpu.memory_space<vmem>>, vector<1x128xf32>
    %3 = vector.broadcast %2 : vector<1x128xf32> to vector<512x128xf32>
    %4 = arith.mulf %1, %3 : vector<512x128xf32>
    %c0_3 = arith.constant 0 : index
    %c0_4 = arith.constant 0 : index
    %5 = vector.load %arg3[%c0_3, %c0_4] : memref<1x128xf32, #tpu.memory_space<vmem>>, vector<1x128xf32>
    %6 = vector.broadcast %5 : vector<1x128xf32> to vector<512x128xf32>
    %7 = arith.addf %4, %6 : vector<512x128xf32>
    %cst = arith.constant 0.000000e+00 : f32
    %8 = vector.broadcast %cst : f32 to vector<512x128xf32>
    %9 = arith.maximumf %7, %8 : vector<512x128xf32>
    %c0_5 = arith.constant 0 : index
    %c0_6 = arith.constant 0 : index
    %10 = vector.load %arg4[%c0_5, %c0_6] : memref<512x128xf32, #tpu.memory_space<vmem>>, vector<512x128xf32>
    tpu.vector_store %arg4[%c0_5, %c0_6], %9 {strides = array<i32>} : memref<512x128xf32, #tpu.memory_space<vmem>>, vector<512x128xf32>,
    return
  }
  func.func @transform_0(%arg0: i32) -> (i32, i32) {
    %c0_i32 = arith.constant 0 : i32
    %c0_i32_0 = arith.constant 0 : i32
    return %arg0, %c0_i32 : i32, i32
  }
  func.func @transform_1(%arg0: i32) -> (i32, i32) {
    %c0_i32 = arith.constant 0 : i32
    %c0_i32_0 = arith.constant 0 : i32
    %c0_i32_1 = arith.constant 0 : i32
    return %c0_i32, %c0_i32_0 : i32, i32
  }
  func.func @transform_2(%arg0: i32) -> (i32, i32) {
    %c0_i32 = arith.constant 0 : i32
    %c0_i32_0 = arith.constant 0 : i32
    %c0_i32_1 = arith.constant 0 : i32
    return %c0_i32, %c0_i32_0 : i32, i32
  }
  func.func @transform_3(%arg0: i32) -> (i32, i32) {
    %c0_i32 = arith.constant 0 : i32
    %c0_i32_0 = arith.constant 0 : i32
    return %arg0, %c0_i32 : i32, i32
  }
}

</mosaic_0001>

<llo_original>
// kernel: squeeze.34
$region0: #{squeeze.34}
  %s0 = inlined_call_operand.vmem [shape: f32[32], index: 0, kind: input, shape index: {}]
  %s1 = inlined_call_operand.vmem [shape: f32[4,8], index: 1, kind: output, shape index: {}]
  $region1: #{squeeze.34} parent=0
    #allocation0 [shape = 'u8[4096]{0}', space=vmem, size = 0x1000, scoped, tag = 'scoped mem for output reshape']
    #allocation1 [shape = 'u8[4096]{0}', space=vmem, size = 0x1000, scoped, tag = 'scoped mem for input reshape']
    %s3 = ssub.s32 2, 1
    %v4 = vld [vmem:[%s0] sm:%s3]
    %5 = vst [vmem:[#allocation1] sm:%s3] %v4
    %v6 = vld [vmem:[#allocation1] sm:$0x1]
    %vm7 = vcmask 64512
    %8 = vst.msk [vmem:[#allocation0] sm:$0x1] %vm7, %v6
    %v9 = vld [vmem:[#allocation1] sm:$0x1]
    %10 = vrot.lane.b32.xlu0 %v9, 120
    %v11 = vpop.permute.xlu0 %10
    %vm12 = vcmask 64512
    %s13 = scalar_lea.vmem [#allocation0], 1
    %14 = vst.msk [vmem:[%s13] sm:$0x1] %vm12, %v11
    %v15 = vld [vmem:[#allocation1] sm:$0x1]
    %16 = vrot.lane.b32.xlu0 %v15, 112
    %v17 = vpop.permute.xlu0 %16
    %vm18 = vcmask 64512
    %s19 = scalar_lea.vmem [#allocation0], 2
    %20 = vst.msk [vmem:[%s19] sm:$0x1] %vm18, %v17
    %v21 = vld [vmem:[#allocation1] sm:$0x1]
    %22 = vrot.lane.b32.xlu0 %v21, 104
    %v23 = vpop.permute.xlu0 %22
    %vm24 = vcmask 64512
    %s25 = scalar_lea.vmem [#allocation0], 3
    %26 = vst.msk [vmem:[%s25] sm:$0x1] %vm24, %v23
    %s28 = ssub.s32 16, 1
    %v29 = vld [vmem:[#allocation0] sm:%s28]
    %s31 = ssub.s32 16, 1
    %32 = vst [vmem:[%s1] sm:%s31] %v29

// kernel: tile.18
$region0: #{tile.18}
  #allocation0 [shape = 's32[1]{0}', space=sflag, size = 0x4, scoped, tag = 'scoped memory for tile.18']
  %s0 = inlined_call_operand.vmem [shape: f32[8], index: 0, kind: input, shape index: {}]
  %s1 = inlined_call_operand.vmem [shape: f32[4,8], index: 1, kind: output, shape index: {}]
  // Predicated region
  $region2: #{tile.18} parent=0 // pred_check
    _
  $region3: #{tile.18} parent=0 // pred_check_branch
    %3 = sbr.rel (0) target = $region5
  $region4: #{tile.18} parent=0 // pred_region
    _
  $region5: #{tile.18} parent=0 // pred_fallthru
    _
  %v4 = vld [vmem:[%s0] ss:$0 sm:$0xff]
  %5 = vst [vmem:[%s1] sm:$0xf] %v4

// kernel: gen_block_forward.3
$region0: #{gen_block_forward.3}
  #allocation0 [shape = 'u32[]', space=smem, size = 0x4, offset = 0x4, fixed_abs, tag = 'smem constant byte address 0x4 - core index']
  #allocation1 [shape = 'u32[72,128]{1,0:T(1,128)}', space=vmem, size = 0x9000, scoped, tag = 'internal scratch']
  %s0 = inlined_call_operand.vmem [shape: bf16[512,128], index: 0, kind: input, shape index: {}]
  %s1 = inlined_call_operand.vmem [shape: f32[1,128], index: 1, kind: input, shape index: {}]
  %s2 = inlined_call_operand.vmem [shape: f32[1,128], index: 2, kind: input, shape index: {}]
  %s3 = inlined_call_operand.vmem [shape: f32[512,128], index: 3, kind: output, shape index: {}]
  %s4 = sld [smem:[#allocation0]]
  $region22: #{gen_block_forward.3} parent=0
    _
  %s6 = ssub.s32 1, %s4
  %s7 = scalar_select 0, %s6, %s4
  // Predicated region
  $region2: #{gen_block_forward.3} parent=0 // pred_check
    _
  $region3: #{gen_block_forward.3} parent=0 // pred_check_branch
    %9 = sbr.rel (0) target = $region5
  $region4: #{gen_block_forward.3} parent=0 // pred_region
    _
  $region5: #{gen_block_forward.3} parent=0 // pred_fallthru
    _
  // Predicated region
  $region6: #{gen_block_forward.3} parent=0 // pred_check
    _
  $region7: #{gen_block_forward.3} parent=0 // pred_check_branch
    %11 = sbr.rel (0) target = $region9
  $region8: #{gen_block_forward.3} parent=0 // pred_region
    _
  $region9: #{gen_block_forward.3} parent=0 // pred_fallthru
    _
  // Predicated region
  $region10: #{gen_block_forward.3} parent=0 // pred_check
    _
  $region11: #{gen_block_forward.3} parent=0 // pred_check_branch
    %13 = sbr.rel (0) target = $region13
  $region12: #{gen_block_forward.3} parent=0 // pred_region
    _
  $region13: #{gen_block_forward.3} parent=0 // pred_fallthru
    _
  %v14 = vld [vmem:[%s0] sm:$0xf]
  %v15 = vld [vmem:[%s0 + $0x4] sm:$0xf]
  %v16 = vld [vmem:[%s0 + $0x8] sm:$0xf]
  %v17 = vld [vmem:[%s0 + $0xc] sm:$0xf]
  %v18 = vld [vmem:[%s0 + $0x10] sm:$0xf]
  %v19 = vld [vmem:[%s0 + $0x14] sm:$0xf]
  %v20 = vld [vmem:[%s0 + $0x18] sm:$0xf]
  %v21 = vld [vmem:[%s0 + $0x1c] sm:$0xf]
  %v22 = vld [vmem:[%s0 + $0x20] sm:$0xf]
  %v23 = vld [vmem:[%s0 + $0x24] sm:$0xf]
  %v24 = vld [vmem:[%s0 + $0x28] sm:$0xf]
  %v25 = vld [vmem:[%s0 + $0x2c] sm:$0xf]
  %v26 = vld [vmem:[%s0 + $0x30] sm:$0xf]
  %v27 = vld [vmem:[%s0 + $0x34] sm:$0xf]
  %v28 = vld [vmem:[%s0 + $0x38] sm:$0xf]
  %v29 = vld [vmem:[%s0 + $0x3c] sm:$0xf]
  %v30 = vld [vmem:[%s0 + $0x40] sm:$0xf]
  %v31 = vld [vmem:[%s0 + $0x44] sm:$0xf]
  %v32 = vld [vmem:[%s0 + $0x48] sm:$0xf]
  %v33 = vld [vmem:[%s0 + $0x4c] sm:$0xf]
  %v34 = vld [vmem:[%s0 + $0x50] sm:$0xf]
  %v35 = vld [vmem:[%s0 + $0x54] sm:$0xf]
  %v36 = vld [vmem:[%s0 + $0x58] sm:$0xf]
  %v37 = vld [vmem:[%s0 + $0x5c] sm:$0xf]
  %v38 = vld [vmem:[%s0 + $0x60] sm:$0xf]
  %v39 = vld [vmem:[%s0 + $0x64] sm:$0xf]
  %v40 = vld [vmem:[%s0 + $0x68] sm:$0xf]
  %v41 = vld [vmem:[%s0 + $0x6c] sm:$0xf]
  %v42 = vld [vmem:[%s0 + $0x70] sm:$0xf]
  %v43 = vld [vmem:[%s0 + $0x74] sm:$0xf]
  %v44 = vld [vmem:[%s0 + $0x78] sm:$0xf]
  %v45 = vld [vmem:[%s0 + $0x7c] sm:$0xf]
  %v46 = vld [vmem:[%s0 + $0x80] sm:$0xf]
  %v47 = vld [vmem:[%s0 + $0x84] sm:$0xf]
  %v48 = vld [vmem:[%s0 + $0x88] sm:$0xf]
  %v49 = vld [vmem:[%s0 + $0x8c] sm:$0xf]
  %v50 = vld [vmem:[%s0 + $0x90] sm:$0xf]
  %v51 = vld [vmem:[%s0 + $0x94] sm:$0xf]
  %v52 = vld [vmem:[%s0 + $0x98] sm:$0xf]
  %v53 = vld [vmem:[%s0 + $0x9c] sm:$0xf]
  %v54 = vld [vmem:[%s0 + $0xa0] sm:$0xf]
  %v55 = vld [vmem:[%s0 + $0xa4] sm:$0xf]
  %v56 = vld [vmem:[%s0 + $0xa8] sm:$0xf]
  %v57 = vld [vmem:[%s0 + $0xac] sm:$0xf]
  %v58 = vld [vmem:[%s0 + $0xb0] sm:$0xf]
  %v59 = vld [vmem:[%s0 + $0xb4] sm:$0xf]
  %v60 = vld [vmem:[%s0 + $0xb8] sm:$0xf]
  %v61 = vld [vmem:[%s0 + $0xbc] sm:$0xf]
  %v62 = vld [vmem:[%s0 + $0xc0] sm:$0xf]
  %v63 = vld [vmem:[%s0 + $0xc4] sm:$0xf]
  %v64 = vld [vmem:[%s0 + $0xc8] sm:$0xf]
  %v65 = vld [vmem:[%s0 + $0xcc] sm:$0xf]
  %v66 = vld [vmem:[%s0 + $0xd0] sm:$0xf]
  %v67 = vld [vmem:[%s0 + $0xd4] sm:$0xf]
  %v68 = vld [vmem:[%s0 + $0xd8] sm:$0xf]
  %v69 = vld [vmem:[%s0 + $0xdc] sm:$0xf]
  %v70 = vld [vmem:[%s0 + $0xe0] sm:$0xf]
  %v71 = vld [vmem:[%s0 + $0xe4] sm:$0xf]
  %v72 = vld [vmem:[%s0 + $0xe8] sm:$0xf]
  %v73 = vld [vmem:[%s0 + $0xec] sm:$0xf]
  %v74 = vld [vmem:[%s0 + $0xf0] sm:$0xf]
  %v75 = vld [vmem:[%s0 + $0xf4] sm:$0xf]
  %v76 = vld [vmem:[%s0 + $0xf8] sm:$0xf]
  %v77 = vld [vmem:[%s0 + $0xfc] sm:$0xf]
  %v78 = vunpack.c.l.bf16 %v14
  %v79 = vunpack.c.l.bf16 %v15
  %v80 = vunpack.c.l.bf16 %v16
  %v81 = vunpack.c.l.bf16 %v17
  %v82 = vunpack.c.l.bf16 %v18
  %v83 = vunpack.c.l.bf16 %v19
  %v84 = vunpack.c.l.bf16 %v20
  %v85 = vunpack.c.l.bf16 %v21
  %v86 = vunpack.c.l.bf16 %v22
  %v87 = vunpack.c.l.bf16 %v23
  %v88 = vunpack.c.l.bf16 %v24
  %v89 = vunpack.c.l.bf16 %v25
  %v90 = vunpack.c.l.bf16 %v26
  %v91 = vunpack.c.l.bf16 %v27
  %v92 = vunpack.c.l.bf16 %v28
  %v93 = vunpack.c.l.bf16 %v29
  %v94 = vunpack.c.l.bf16 %v30
  %v95 = vunpack.c.l.bf16 %v31
  %v96 = vunpack.c.l.bf16 %v32
  %v97 = vunpack.c.l.bf16 %v33
  %v98 = vunpack.c.l.bf16 %v34
  %v99 = vunpack.c.l.bf16 %v35
  %v100 = vunpack.c.l.bf16 %v36
  %v101 = vunpack.c.l.bf16 %v37
  %v102 = vunpack.c.l.bf16 %v38
  %v103 = vunpack.c.l.bf16 %v39
  %v104 = vunpack.c.l.bf16 %v40
  %v105 = vunpack.c.l.bf16 %v41
  %v106 = vunpack.c.l.bf16 %v42
  %v107 = vunpack.c.l.bf16 %v43
  %v108 = vunpack.c.l.bf16 %v44
  %v109 = vunpack.c.l.bf16 %v45
  %v110 = vunpack.c.l.bf16 %v46
  %v111 = vunpack.c.l.bf16 %v47
  %v112 = vunpack.c.l.bf16 %v48
  %v113 = vunpack.c.l.bf16 %v49
  %v114 = vunpack.c.l.bf16 %v50
  %v115 = vunpack.c.l.bf16 %v51
  %v116 = vunpack.c.l.bf16 %v52
  %v117 = vunpack.c.l.bf16 %v53
  %v118 = vunpack.c.l.bf16 %v54
  %v119 = vunpack.c.l.bf16 %v55
  %v120 = vunpack.c.l.bf16 %v56
  %v121 = vunpack.c.l.bf16 %v57
  %v122 = vunpack.c.l.bf16 %v58
  %v123 = vunpack.c.l.bf16 %v59
  %v124 = vunpack.c.l.bf16 %v60
  %v125 = vunpack.c.l.bf16 %v61
  %v126 = vunpack.c.l.bf16 %v62
  %v127 = vunpack.c.l.bf16 %v63
  %v128 = vunpack.c.l.bf16 %v64
  %v129 = vunpack.c.l.bf16 %v65
  %v130 = vunpack.c.l.bf16 %v66
  %v131 = vunpack.c.l.bf16 %v67
  %v132 = vunpack.c.l.bf16 %v68
  %v133 = vunpack.c.l.bf16 %v69
  %v134 = vunpack.c.l.bf16 %v70
  %v135 = vunpack.c.l.bf16 %v71
  %v136 = vunpack.c.l.bf16 %v72
  %v137 = vunpack.c.l.bf16 %v73
  %v138 = vunpack.c.l.bf16 %v74
  %v139 = vunpack.c.l.bf16 %v75
  %v140 = vunpack.c.l.bf16 %v76
  %v141 = vunpack.c.l.bf16 %v77
  %v142 = vld [vmem:[%s1] sm:$0x1]
  %v144 = vperm.slane %v142, 0
  %v146 = vmul.f32 %v78, %v144
  %v147 = vmul.f32 %v79, %v144
  %v148 = vmul.f32 %v80, %v144
  %v149 = vmul.f32 %v81, %v144
  %v150 = vmul.f32 %v82, %v144
  %v151 = vmul.f32 %v83, %v144
  %v152 = vmul.f32 %v84, %v144
  %v153 = vmul.f32 %v85, %v144
  %v154 = vmul.f32 %v86, %v144
  %v155 = vmul.f32 %v87, %v144
  %v156 = vmul.f32 %v88, %v144
  %v157 = vmul.f32 %v89, %v144
  %v158 = vmul.f32 %v90, %v144
  %v159 = vmul.f32 %v91, %v144
  %v160 = vmul.f32 %v92, %v144
  %v161 = vmul.f32 %v93, %v144
  %v162 = vmul.f32 %v94, %v144
  %v163 = vmul.f32 %v95, %v144
  %v164 = vmul.f32 %v96, %v144
  %v165 = vmul.f32 %v97, %v144
  %v166 = vmul.f32 %v98, %v144
  %v167 = vmul.f32 %v99, %v144
  %v168 = vmul.f32 %v100, %v144
  %v169 = vmul.f32 %v101, %v144
  %v170 = vmul.f32 %v102, %v144
  %v171 = vmul.f32 %v103, %v144
  %v172 = vmul.f32 %v104, %v144
  %v173 = vmul.f32 %v105, %v144
  %v174 = vmul.f32 %v106, %v144
  %v175 = vmul.f32 %v107, %v144
  %v176 = vmul.f32 %v108, %v144
  %v177 = vmul.f32 %v109, %v144
  %v178 = vmul.f32 %v110, %v144
  %v179 = vmul.f32 %v111, %v144
  %v180 = vmul.f32 %v112, %v144
  %v181 = vmul.f32 %v113, %v144
  %v182 = vmul.f32 %v114, %v144
  %v183 = vmul.f32 %v115, %v144
  %v184 = vmul.f32 %v116, %v144
  %v185 = vmul.f32 %v117, %v144
  %v186 = vmul.f32 %v118, %v144
  %v187 = vmul.f32 %v119, %v144
  %v188 = vmul.f32 %v120, %v144
  %v189 = vmul.f32 %v121, %v144
  %v190 = vmul.f32 %v122, %v144
  %v191 = vmul.f32 %v123, %v144
  %v192 = vmul.f32 %v124, %v144
  %v193 = vmul.f32 %v125, %v144
  %v194 = vmul.f32 %v126, %v144
  %v195 = vmul.f32 %v127, %v144
  %v196 = vmul.f32 %v128, %v144
  %v197 = vmul.f32 %v129, %v144
  %v198 = vmul.f32 %v130, %v144
  %v199 = vmul.f32 %v131, %v144
  %v200 = vmul.f32 %v132, %v144
  %v201 = vmul.f32 %v133, %v144
  %v202 = vmul.f32 %v134, %v144
  %v203 = vmul.f32 %v135, %v144
  %v204 = vmul.f32 %v136, %v144
  %v205 = vmul.f32 %v137, %v144
  %v206 = vmul.f32 %v138, %v144
  %v207 = vmul.f32 %v139, %v144
  %v208 = vmul.f32 %v140, %v144
  %v209 = vmul.f32 %v141, %v144
  %v210 = vld [vmem:[%s2] sm:$0x1]
  %v212 = vperm.slane %v210, 0
  %v214 = vadd.f32 %v146, %v212
  %v215 = vadd.f32 %v147, %v212
  %v216 = vadd.f32 %v148, %v212
  %v217 = vadd.f32 %v149, %v212
  %v218 = vadd.f32 %v150, %v212
  %v219 = vadd.f32 %v151, %v212
  %v220 = vadd.f32 %v152, %v212
  %v221 = vadd.f32 %v153, %v212
  %v222 = vadd.f32 %v154, %v212
  %v223 = vadd.f32 %v155, %v212
  %v224 = vadd.f32 %v156, %v212
  %v225 = vadd.f32 %v157, %v212
  %v226 = vadd.f32 %v158, %v212
  %v227 = vadd.f32 %v159, %v212
  %v228 = vadd.f32 %v160, %v212
  %v229 = vadd.f32 %v161, %v212
  %v230 = vadd.f32 %v162, %v212
  %v231 = vadd.f32 %v163, %v212
  %v232 = vadd.f32 %v164, %v212
  %v233 = vadd.f32 %v165, %v212
  %v234 = vadd.f32 %v166, %v212
  %v235 = vadd.f32 %v167, %v212
  %v236 = vadd.f32 %v168, %v212
  %v237 = vadd.f32 %v169, %v212
  %v238 = vadd.f32 %v170, %v212
  %v239 = vadd.f32 %v171, %v212
  %v240 = vadd.f32 %v172, %v212
  %v241 = vadd.f32 %v173, %v212
  %v242 = vadd.f32 %v174, %v212
  %v243 = vadd.f32 %v175, %v212
  %v244 = vadd.f32 %v176, %v212
  %v245 = vadd.f32 %v177, %v212
  %v246 = vadd.f32 %v178, %v212
  %v247 = vadd.f32 %v179, %v212
  %v248 = vadd.f32 %v180, %v212
  %v249 = vadd.f32 %v181, %v212
  %v250 = vadd.f32 %v182, %v212
  %v251 = vadd.f32 %v183, %v212
  %v252 = vadd.f32 %v184, %v212
  %v253 = vadd.f32 %v185, %v212
  %v254 = vadd.f32 %v186, %v212
  %v255 = vadd.f32 %v187, %v212
  %v256 = vadd.f32 %v188, %v212
  %v257 = vadd.f32 %v189, %v212
  %v258 = vadd.f32 %v190, %v212
  %v259 = vadd.f32 %v191, %v212
  %v260 = vadd.f32 %v192, %v212
  %v261 = vadd.f32 %v193, %v212
  %v262 = vadd.f32 %v194, %v212
  %v263 = vadd.f32 %v195, %v212
  %v264 = vadd.f32 %v196, %v212
  %v265 = vadd.f32 %v197, %v212
  %v266 = vadd.f32 %v198, %v212
  %v267 = vadd.f32 %v199, %v212
  %v268 = vadd.f32 %v200, %v212
  %v269 = vadd.f32 %v201, %v212
  %v270 = vadd.f32 %v202, %v212
  %v271 = vadd.f32 %v203, %v212
  %v272 = vadd.f32 %v204, %v212
  %v273 = vadd.f32 %v205, %v212
  %v274 = vadd.f32 %v206, %v212
  %v275 = vadd.f32 %v207, %v212
  %v276 = vadd.f32 %v208, %v212
  %v277 = vadd.f32 %v209, %v212
  %v278 = vmax.f32 %v214, 0.0
  %v279 = vmax.f32 %v215, 0.0
  %v280 = vmax.f32 %v216, 0.0
  %v281 = vmax.f32 %v217, 0.0
  %v282 = vmax.f32 %v218, 0.0
  %v283 = vmax.f32 %v219, 0.0
  %v284 = vmax.f32 %v220, 0.0
  %v285 = vmax.f32 %v221, 0.0
  %v286 = vmax.f32 %v222, 0.0
  %v287 = vmax.f32 %v223, 0.0
  %v288 = vmax.f32 %v224, 0.0
  %v289 = vmax.f32 %v225, 0.0
  %v290 = vmax.f32 %v226, 0.0
  %v291 = vmax.f32 %v227, 0.0
  %v292 = vmax.f32 %v228, 0.0
  %v293 = vmax.f32 %v229, 0.0
  %v294 = vmax.f32 %v230, 0.0
  %v295 = vmax.f32 %v231, 0.0
  %v296 = vmax.f32 %v232, 0.0
  %v297 = vmax.f32 %v233, 0.0
  %v298 = vmax.f32 %v234, 0.0
  %v299 = vmax.f32 %v235, 0.0
  %v300 = vmax.f32 %v236, 0.0
  %v301 = vmax.f32 %v237, 0.0
  %v302 = vmax.f32 %v238, 0.0
  %v303 = vmax.f32 %v239, 0.0
  %v304 = vmax.f32 %v240, 0.0
  %v305 = vmax.f32 %v241, 0.0
  %v306 = vmax.f32 %v242, 0.0
  %v307 = vmax.f32 %v243, 0.0
  %v308 = vmax.f32 %v244, 0.0
  %v309 = vmax.f32 %v245, 0.0
  %v310 = vmax.f32 %v246, 0.0
  %v311 = vmax.f32 %v247, 0.0
  %v312 = vmax.f32 %v248, 0.0
  %v313 = vmax.f32 %v249, 0.0
  %v314 = vmax.f32 %v250, 0.0
  %v315 = vmax.f32 %v251, 0.0
  %v316 = vmax.f32 %v252, 0.0
  %v317 = vmax.f32 %v253, 0.0
  %v318 = vmax.f32 %v254, 0.0
  %v319 = vmax.f32 %v255, 0.0
  %v320 = vmax.f32 %v256, 0.0
  %v321 = vmax.f32 %v257, 0.0
  %v322 = vmax.f32 %v258, 0.0
  %v323 = vmax.f32 %v259, 0.0
  %v324 = vmax.f32 %v260, 0.0
  %v325 = vmax.f32 %v261, 0.0
  %v326 = vmax.f32 %v262, 0.0
  %v327 = vmax.f32 %v263, 0.0
  %v328 = vmax.f32 %v264, 0.0
  %v329 = vmax.f32 %v265, 0.0
  %v330 = vmax.f32 %v266, 0.0
  %v331 = vmax.f32 %v267, 0.0
  %v332 = vmax.f32 %v268, 0.0
  %v333 = vmax.f32 %v269, 0.0
  %v334 = vmax.f32 %v270, 0.0
  %v335 = vmax.f32 %v271, 0.0
  %v336 = vmax.f32 %v272, 0.0
  %v337 = vmax.f32 %v273, 0.0
  %v338 = vmax.f32 %v274, 0.0
  %v339 = vmax.f32 %v275, 0.0
  %v340 = vmax.f32 %v276, 0.0
  %v341 = vmax.f32 %v277, 0.0
  %342 = vst [vmem:[%s3] sm:$0xff] %v278
  %343 = vst [vmem:[%s3 + $0x8] sm:$0xff] %v279
  %344 = vst [vmem:[%s3 + $0x10] sm:$0xff] %v280
  %345 = vst [vmem:[%s3 + $0x18] sm:$0xff] %v281
  %346 = vst [vmem:[%s3 + $0x20] sm:$0xff] %v282
  %347 = vst [vmem:[%s3 + $0x28] sm:$0xff] %v283
  %348 = vst [vmem:[%s3 + $0x30] sm:$0xff] %v284
  %349 = vst [vmem:[%s3 + $0x38] sm:$0xff] %v285
  %350 = vst [vmem:[%s3 + $0x40] sm:$0xff] %v286
  %351 = vst [vmem:[%s3 + $0x48] sm:$0xff] %v287
  %352 = vst [vmem:[%s3 + $0x50] sm:$0xff] %v288
  %353 = vst [vmem:[%s3 + $0x58] sm:$0xff] %v289
  %354 = vst [vmem:[%s3 + $0x60] sm:$0xff] %v290
  %355 = vst [vmem:[%s3 + $0x68] sm:$0xff] %v291
  %356 = vst [vmem:[%s3 + $0x70] sm:$0xff] %v292
  %357 = vst [vmem:[%s3 + $0x78] sm:$0xff] %v293
  %358 = vst [vmem:[%s3 + $0x80] sm:$0xff] %v294
  %359 = vst [vmem:[%s3 + $0x88] sm:$0xff] %v295
  %360 = vst [vmem:[%s3 + $0x90] sm:$0xff] %v296
  %361 = vst [vmem:[%s3 + $0x98] sm:$0xff] %v297
  %362 = vst [vmem:[%s3 + $0xa0] sm:$0xff] %v298
  %363 = vst [vmem:[%s3 + $0xa8] sm:$0xff] %v299
  %364 = vst [vmem:[%s3 + $0xb0] sm:$0xff] %v300
  %365 = vst [vmem:[%s3 + $0xb8] sm:$0xff] %v301
  %366 = vst [vmem:[%s3 + $0xc0] sm:$0xff] %v302
  %367 = vst [vmem:[%s3 + $0xc8] sm:$0xff] %v303
  %368 = vst [vmem:[%s3 + $0xd0] sm:$0xff] %v304
  %369 = vst [vmem:[%s3 + $0xd8] sm:$0xff] %v305
  %370 = vst [vmem:[%s3 + $0xe0] sm:$0xff] %v306
  %371 = vst [vmem:[%s3 + $0xe8] sm:$0xff] %v307
  %372 = vst [vmem:[%s3 + $0xf0] sm:$0xff] %v308
  %373 = vst [vmem:[%s3 + $0xf8] sm:$0xff] %v309
  %374 = vst [vmem:[%s3 + $0x100] sm:$0xff] %v310
  %375 = vst [vmem:[%s3 + $0x108] sm:$0xff] %v311
  %376 = vst [vmem:[%s3 + $0x110] sm:$0xff] %v312
  %377 = vst [vmem:[%s3 + $0x118] sm:$0xff] %v313
  %378 = vst [vmem:[%s3 + $0x120] sm:$0xff] %v314
  %379 = vst [vmem:[%s3 + $0x128] sm:$0xff] %v315
  %380 = vst [vmem:[%s3 + $0x130] sm:$0xff] %v316
  %381 = vst [vmem:[%s3 + $0x138] sm:$0xff] %v317
  %382 = vst [vmem:[%s3 + $0x140] sm:$0xff] %v318
  %383 = vst [vmem:[%s3 + $0x148] sm:$0xff] %v319
  %384 = vst [vmem:[%s3 + $0x150] sm:$0xff] %v320
  %385 = vst [vmem:[%s3 + $0x158] sm:$0xff] %v321
  %386 = vst [vmem:[%s3 + $0x160] sm:$0xff] %v322
  %387 = vst [vmem:[%s3 + $0x168] sm:$0xff] %v323
  %388 = vst [vmem:[%s3 + $0x170] sm:$0xff] %v324
  %389 = vst [vmem:[%s3 + $0x178] sm:$0xff] %v325
  %390 = vst [vmem:[%s3 + $0x180] sm:$0xff] %v326
  %391 = vst [vmem:[%s3 + $0x188] sm:$0xff] %v327
  %392 = vst [vmem:[%s3 + $0x190] sm:$0xff] %v328
  %393 = vst [vmem:[%s3 + $0x198] sm:$0xff] %v329
  %394 = vst [vmem:[%s3 + $0x1a0] sm:$0xff] %v330
  %395 = vst [vmem:[%s3 + $0x1a8] sm:$0xff] %v331
  %396 = vst [vmem:[%s3 + $0x1b0] sm:$0xff] %v332
  %397 = vst [vmem:[%s3 + $0x1b8] sm:$0xff] %v333
  %398 = vst [vmem:[%s3 + $0x1c0] sm:$0xff] %v334
  %399 = vst [vmem:[%s3 + $0x1c8] sm:$0xff] %v335
  %400 = vst [vmem:[%s3 + $0x1d0] sm:$0xff] %v336
  %401 = vst [vmem:[%s3 + $0x1d8] sm:$0xff] %v337
  %402 = vst [vmem:[%s3 + $0x1e0] sm:$0xff] %v338
  %403 = vst [vmem:[%s3 + $0x1e8] sm:$0xff] %v339
  %404 = vst [vmem:[%s3 + $0x1f0] sm:$0xff] %v340
  %405 = vst [vmem:[%s3 + $0x1f8] sm:$0xff] %v341
  // Predicated region
  $region14: #{gen_block_forward.3} parent=0 // pred_check
    _
  $region15: #{gen_block_forward.3} parent=0 // pred_check_branch
    %407 = sbr.rel (0) target = $region17
  $region16: #{gen_block_forward.3} parent=0 // pred_region
    _
  $region17: #{gen_block_forward.3} parent=0 // pred_fallthru
    _
  // Predicated region
  $region18: #{gen_block_forward.3} parent=0 // pred_check
    _
  $region19: #{gen_block_forward.3} parent=0 // pred_check_branch
    %409 = sbr.rel (0) target = $region21
  $region20: #{gen_block_forward.3} parent=0 // pred_region
    _
  $region21: #{gen_block_forward.3} parent=0 // pred_fallthru
    _

// kernel: gen_block_forward.2
$region0: #{gen_block_forward.2}
  #allocation0 [shape = 'u32[]', space=smem, size = 0x4, offset = 0x4, fixed_abs, tag = 'smem constant byte address 0x4 - core index']
  #allocation1 [shape = 'u32[72,128]{1,0:T(1,128)}', space=vmem, size = 0x9000, scoped, tag = 'internal scratch']
  %s0 = inlined_call_operand.vmem [shape: bf16[512,128], index: 0, kind: input, shape index: {}]
  %s1 = inlined_call_operand.vmem [shape: bf16[128,128], index: 1, kind: input, shape index: {}]
  %s2 = inlined_call_operand.vmem [shape: bf16[512,128], index: 2, kind: output, shape index: {0}]
  %s3 = inlined_call_operand.vmem [shape: f32[2,128], index: 3, kind: output, shape index: {1}]
  %4 = xla_tuple %s2, %s3
  %s5 = sld [smem:[#allocation0]]
  $region30: #{gen_block_forward.2} parent=0
    _
  %s7 = ssub.s32 1, %s5
  %s8 = scalar_select 0, %s7, %s5
  // Predicated region
  $region2: #{gen_block_forward.2} parent=0 // pred_check
    _
  $region3: #{gen_block_forward.2} parent=0 // pred_check_branch
    %10 = sbr.rel (0) target = $region5
  $region4: #{gen_block_forward.2} parent=0 // pred_region
    _
  $region5: #{gen_block_forward.2} parent=0 // pred_fallthru
    _
  // Predicated region
  $region6: #{gen_block_forward.2} parent=0 // pred_check
    _
  $region7: #{gen_block_forward.2} parent=0 // pred_check_branch
    %12 = sbr.rel (0) target = $region9
  $region8: #{gen_block_forward.2} parent=0 // pred_region
    _
  $region9: #{gen_block_forward.2} parent=0 // pred_fallthru
    _
  %v13 = vld [vmem:[%s0] sm:$0xf]
  %v14 = vld [vmem:[%s0 + $0x4] sm:$0xf]
  %v15 = vld [vmem:[%s0 + $0x8] sm:$0xf]
  %v16 = vld [vmem:[%s0 + $0xc] sm:$0xf]
  %v17 = vld [vmem:[%s0 + $0x10] sm:$0xf]
  %v18 = vld [vmem:[%s0 + $0x14] sm:$0xf]
  %v19 = vld [vmem:[%s0 + $0x18] sm:$0xf]
  %v20 = vld [vmem:[%s0 + $0x1c] sm:$0xf]
  %v21 = vld [vmem:[%s0 + $0x20] sm:$0xf]
  %v22 = vld [vmem:[%s0 + $0x24] sm:$0xf]
  %v23 = vld [vmem:[%s0 + $0x28] sm:$0xf]
  %v24 = vld [vmem:[%s0 + $0x2c] sm:$0xf]
  %v25 = vld [vmem:[%s0 + $0x30] sm:$0xf]
  %v26 = vld [vmem:[%s0 + $0x34] sm:$0xf]
  %v27 = vld [vmem:[%s0 + $0x38] sm:$0xf]
  %v28 = vld [vmem:[%s0 + $0x3c] sm:$0xf]
  %v29 = vld [vmem:[%s0 + $0x40] sm:$0xf]
  %v30 = vld [vmem:[%s0 + $0x44] sm:$0xf]
  %v31 = vld [vmem:[%s0 + $0x48] sm:$0xf]
  %v32 = vld [vmem:[%s0 + $0x4c] sm:$0xf]
  %v33 = vld [vmem:[%s0 + $0x50] sm:$0xf]
  %v34 = vld [vmem:[%s0 + $0x54] sm:$0xf]
  %v35 = vld [vmem:[%s0 + $0x58] sm:$0xf]
  %v36 = vld [vmem:[%s0 + $0x5c] sm:$0xf]
  %v37 = vld [vmem:[%s0 + $0x60] sm:$0xf]
  %v38 = vld [vmem:[%s0 + $0x64] sm:$0xf]
  %v39 = vld [vmem:[%s0 + $0x68] sm:$0xf]
  %v40 = vld [vmem:[%s0 + $0x6c] sm:$0xf]
  %v41 = vld [vmem:[%s0 + $0x70] sm:$0xf]
  %v42 = vld [vmem:[%s0 + $0x74] sm:$0xf]
  %v43 = vld [vmem:[%s0 + $0x78] sm:$0xf]
  %v44 = vld [vmem:[%s0 + $0x7c] sm:$0xf]
  %v45 = vld [vmem:[%s0 + $0x80] sm:$0xf]
  %v46 = vld [vmem:[%s0 + $0x84] sm:$0xf]
  %v47 = vld [vmem:[%s0 + $0x88] sm:$0xf]
  %v48 = vld [vmem:[%s0 + $0x8c] sm:$0xf]
  %v49 = vld [vmem:[%s0 + $0x90] sm:$0xf]
  %v50 = vld [vmem:[%s0 + $0x94] sm:$0xf]
  %v51 = vld [vmem:[%s0 + $0x98] sm:$0xf]
  %v52 = vld [vmem:[%s0 + $0x9c] sm:$0xf]
  %v53 = vld [vmem:[%s0 + $0xa0] sm:$0xf]
  %v54 = vld [vmem:[%s0 + $0xa4] sm:$0xf]
  %v55 = vld [vmem:[%s0 + $0xa8] sm:$0xf]
  %v56 = vld [vmem:[%s0 + $0xac] sm:$0xf]
  %v57 = vld [vmem:[%s0 + $0xb0] sm:$0xf]
  %v58 = vld [vmem:[%s0 + $0xb4] sm:$0xf]
  %v59 = vld [vmem:[%s0 + $0xb8] sm:$0xf]
  %v60 = vld [vmem:[%s0 + $0xbc] sm:$0xf]
  %v61 = vld [vmem:[%s0 + $0xc0] sm:$0xf]
  %v62 = vld [vmem:[%s0 + $0xc4] sm:$0xf]
  %v63 = vld [vmem:[%s0 + $0xc8] sm:$0xf]
  %v64 = vld [vmem:[%s0 + $0xcc] sm:$0xf]
  %v65 = vld [vmem:[%s0 + $0xd0] sm:$0xf]
  %v66 = vld [vmem:[%s0 + $0xd4] sm:$0xf]
  %v67 = vld [vmem:[%s0 + $0xd8] sm:$0xf]
  %v68 = vld [vmem:[%s0 + $0xdc] sm:$0xf]
  %v69 = vld [vmem:[%s0 + $0xe0] sm:$0xf]
  %v70 = vld [vmem:[%s0 + $0xe4] sm:$0xf]
  %v71 = vld [vmem:[%s0 + $0xe8] sm:$0xf]
  %v72 = vld [vmem:[%s0 + $0xec] sm:$0xf]
  %v73 = vld [vmem:[%s0 + $0xf0] sm:$0xf]
  %v74 = vld [vmem:[%s0 + $0xf4] sm:$0xf]
  %v75 = vld [vmem:[%s0 + $0xf8] sm:$0xf]
  %v76 = vld [vmem:[%s0 + $0xfc] sm:$0xf]
  %v77 = vld [vmem:[%s1] sm:$0xf]
  %v78 = vld [vmem:[%s1 + $0x4] sm:$0xf]
  %v79 = vld [vmem:[%s1 + $0x8] sm:$0xf]
  %v80 = vld [vmem:[%s1 + $0xc] sm:$0xf]
  %v81 = vld [vmem:[%s1 + $0x10] sm:$0xf]
  %v82 = vld [vmem:[%s1 + $0x14] sm:$0xf]
  %v83 = vld [vmem:[%s1 + $0x18] sm:$0xf]
  %v84 = vld [vmem:[%s1 + $0x1c] sm:$0xf]
  %v85 = vld [vmem:[%s1 + $0x20] sm:$0xf]
  %v86 = vld [vmem:[%s1 + $0x24] sm:$0xf]
  %v87 = vld [vmem:[%s1 + $0x28] sm:$0xf]
  %v88 = vld [vmem:[%s1 + $0x2c] sm:$0xf]
  %v89 = vld [vmem:[%s1 + $0x30] sm:$0xf]
  %v90 = vld [vmem:[%s1 + $0x34] sm:$0xf]
  %v91 = vld [vmem:[%s1 + $0x38] sm:$0xf]
  %v92 = vld [vmem:[%s1 + $0x3c] sm:$0xf]
  %v157 = vunpack.c.l.b16 %v13
  %v158 = vunpack.c.l.b16 %v14
  %v159 = vunpack.c.l.b16 %v15
  %v160 = vunpack.c.l.b16 %v16
  %v161 = vunpack.c.l.b16 %v17
  %v162 = vunpack.c.l.b16 %v18
  %v163 = vunpack.c.l.b16 %v19
  %v164 = vunpack.c.l.b16 %v20
  %v165 = vunpack.c.l.b16 %v21
  %v166 = vunpack.c.l.b16 %v22
  %v167 = vunpack.c.l.b16 %v23
  %v168 = vunpack.c.l.b16 %v24
  %v169 = vunpack.c.l.b16 %v25
  %v170 = vunpack.c.l.b16 %v26
  %v171 = vunpack.c.l.b16 %v27
  %v172 = vunpack.c.l.b16 %v28
  %v173 = vunpack.c.l.b16 %v29
  %v174 = vunpack.c.l.b16 %v30
  %v175 = vunpack.c.l.b16 %v31
  %v176 = vunpack.c.l.b16 %v32
  %v177 = vunpack.c.l.b16 %v33
  %v178 = vunpack.c.l.b16 %v34
  %v179 = vunpack.c.l.b16 %v35
  %v180 = vunpack.c.l.b16 %v36
  %v181 = vunpack.c.l.b16 %v37
  %v182 = vunpack.c.l.b16 %v38
  %v183 = vunpack.c.l.b16 %v39
  %v184 = vunpack.c.l.b16 %v40
  %v185 = vunpack.c.l.b16 %v41
  %v186 = vunpack.c.l.b16 %v42
  %v187 = vunpack.c.l.b16 %v43
  %v188 = vunpack.c.l.b16 %v44
  %v189 = vunpack.c.l.b16 %v45
  %v190 = vunpack.c.l.b16 %v46
  %v191 = vunpack.c.l.b16 %v47
  %v192 = vunpack.c.l.b16 %v48
  %v193 = vunpack.c.l.b16 %v49
  %v194 = vunpack.c.l.b16 %v50
  %v195 = vunpack.c.l.b16 %v51
  %v196 = vunpack.c.l.b16 %v52
  %v197 = vunpack.c.l.b16 %v53
  %v198 = vunpack.c.l.b16 %v54
  %v199 = vunpack.c.l.b16 %v55
  %v200 = vunpack.c.l.b16 %v56
  %v201 = vunpack.c.l.b16 %v57
  %v202 = vunpack.c.l.b16 %v58
  %v203 = vunpack.c.l.b16 %v59
  %v204 = vunpack.c.l.b16 %v60
  %v205 = vunpack.c.l.b16 %v61
  %v206 = vunpack.c.l.b16 %v62
  %v207 = vunpack.c.l.b16 %v63
  %v208 = vunpack.c.l.b16 %v64
  %v209 = vunpack.c.l.b16 %v65
  %v210 = vunpack.c.l.b16 %v66
  %v211 = vunpack.c.l.b16 %v67
  %v212 = vunpack.c.l.b16 %v68
  %v213 = vunpack.c.l.b16 %v69
  %v214 = vunpack.c.l.b16 %v70
  %v215 = vunpack.c.l.b16 %v71
  %v216 = vunpack.c.l.b16 %v72
  %v217 = vunpack.c.l.b16 %v73
  %v218 = vunpack.c.l.b16 %v74
  %v219 = vunpack.c.l.b16 %v75
  %v220 = vunpack.c.l.b16 %v76
  %v221 = vpack.c.b16 %v158, %v157
  %v222 = vpack.c.b16 %v160, %v159
  %v223 = vpack.c.b16 %v162, %v161
  %v224 = vpack.c.b16 %v164, %v163
  %v225 = vpack.c.b16 %v166, %v165
  %v226 = vpack.c.b16 %v168, %v167
  %v227 = vpack.c.b16 %v170, %v169
  %v228 = vpack.c.b16 %v172, %v171
  %v229 = vpack.c.b16 %v174, %v173
  %v230 = vpack.c.b16 %v176, %v175
  %v231 = vpack.c.b16 %v178, %v177
  %v232 = vpack.c.b16 %v180, %v179
  %v233 = vpack.c.b16 %v182, %v181
  %v234 = vpack.c.b16 %v184, %v183
  %v235 = vpack.c.b16 %v186, %v185
  %v236 = vpack.c.b16 %v188, %v187
  %v237 = vpack.c.b16 %v190, %v189
  %v238 = vpack.c.b16 %v192, %v191
  %v239 = vpack.c.b16 %v194, %v193
  %v240 = vpack.c.b16 %v196, %v195
  %v241 = vpack.c.b16 %v198, %v197
  %v242 = vpack.c.b16 %v200, %v199
  %v243 = vpack.c.b16 %v202, %v201
  %v244 = vpack.c.b16 %v204, %v203
  %v245 = vpack.c.b16 %v206, %v205
  %v246 = vpack.c.b16 %v208, %v207
  %v247 = vpack.c.b16 %v210, %v209
  %v248 = vpack.c.b16 %v212, %v211
  %v249 = vpack.c.b16 %v214, %v213
  %v250 = vpack.c.b16 %v216, %v215
  %v251 = vpack.c.b16 %v218, %v217
  %v252 = vpack.c.b16 %v220, %v219
  %v301 = vunpack.c.l.b16 %v77
  %v302 = vunpack.c.l.b16 %v78
  %v303 = vunpack.c.l.b16 %v79
  %v304 = vunpack.c.l.b16 %v80
  %v305 = vunpack.c.l.b16 %v81
  %v306 = vunpack.c.l.b16 %v82
  %v307 = vunpack.c.l.b16 %v83
  %v308 = vunpack.c.l.b16 %v84
  %v309 = vunpack.c.l.b16 %v85
  %v310 = vunpack.c.l.b16 %v86
  %v311 = vunpack.c.l.b16 %v87
  %v312 = vunpack.c.l.b16 %v88
  %v313 = vunpack.c.l.b16 %v89
  %v314 = vunpack.c.l.b16 %v90
  %v315 = vunpack.c.l.b16 %v91
  %v316 = vunpack.c.l.b16 %v92
  %v317 = vpack.c.b16 %v302, %v301
  %v318 = vpack.c.b16 %v304, %v303
  %v319 = vpack.c.b16 %v306, %v305
  %v320 = vpack.c.b16 %v308, %v307
  %v321 = vpack.c.b16 %v310, %v309
  %v322 = vpack.c.b16 %v312, %v311
  %v323 = vpack.c.b16 %v314, %v313
  %v324 = vpack.c.b16 %v316, %v315
  %333 = vmatpush.bf16.msra.mxu0 %v324
  %334 = vmatpush.bf16.msra.mxu0 %v323
  %335 = vmatpush.bf16.msra.mxu0 %v322
  %336 = vmatpush.bf16.msra.mxu0 %v321
  %337 = vmatpush.bf16.msra.mxu0 %v320
  %338 = vmatpush.bf16.msra.mxu0 %v319
  %339 = vmatpush.bf16.msra.mxu0 %v318
  %340 = vmatpush.bf16.msra.mxu0 %v317
  %341 = vmatmul.bf16.gmra.mxu0 %v221
  %v342 = vpop.f32.mrf.mxu0
  %v343 = vadd.f32 0.0, %v342
  %v344 = vpop.f32.mrf.mxu0
  %v345 = vadd.f32 0.0, %v344
  %346 = vmatmul.bf16.gmra.mxu0 %v222
  %v347 = vpop.f32.mrf.mxu0
  %v348 = vadd.f32 0.0, %v347
  %v349 = vpop.f32.mrf.mxu0
  %v350 = vadd.f32 0.0, %v349
  %351 = vmatmul.bf16.gmra.mxu0 %v223
  %v352 = vpop.f32.mrf.mxu0
  %v353 = vadd.f32 0.0, %v352
  %v354 = vpop.f32.mrf.mxu0
  %v355 = vadd.f32 0.0, %v354
  %356 = vmatmul.bf16.gmra.mxu0 %v224
  %v357 = vpop.f32.mrf.mxu0
  %v358 = vadd.f32 0.0, %v357
  %v359 = vpop.f32.mrf.mxu0
  %v360 = vadd.f32 0.0, %v359
  %361 = vmatmul.bf16.gmra.mxu0 %v225
  %v362 = vpop.f32.mrf.mxu0
  %v363 = vadd.f32 0.0, %v362
  %v364 = vpop.f32.mrf.mxu0
  %v365 = vadd.f32 0.0, %v364
  %366 = vmatmul.bf16.gmra.mxu0 %v226
  %v367 = vpop.f32.mrf.mxu0
  %v368 = vadd.f32 0.0, %v367
  %v369 = vpop.f32.mrf.mxu0
  %v370 = vadd.f32 0.0, %v369
  %371 = vmatmul.bf16.gmra.mxu0 %v227
  %v372 = vpop.f32.mrf.mxu0
  %v373 = vadd.f32 0.0, %v372
  %v374 = vpop.f32.mrf.mxu0
  %v375 = vadd.f32 0.0, %v374
  %376 = vmatmul.bf16.gmra.mxu0 %v228
  %v377 = vpop.f32.mrf.mxu0
  %v378 = vadd.f32 0.0, %v377
  %v379 = vpop.f32.mrf.mxu0
  %v380 = vadd.f32 0.0, %v379
  %381 = vmatmul.bf16.gmra.mxu0 %v229
  %v382 = vpop.f32.mrf.mxu0
  %v383 = vadd.f32 0.0, %v382
  %v384 = vpop.f32.mrf.mxu0
  %v385 = vadd.f32 0.0, %v384
  %386 = vmatmul.bf16.gmra.mxu0 %v230
  %v387 = vpop.f32.mrf.mxu0
  %v388 = vadd.f32 0.0, %v387
  %v389 = vpop.f32.mrf.mxu0
  %v390 = vadd.f32 0.0, %v389
  %391 = vmatmul.bf16.gmra.mxu0 %v231
  %v392 = vpop.f32.mrf.mxu0
  %v393 = vadd.f32 0.0, %v392
  %v394 = vpop.f32.mrf.mxu0
  %v395 = vadd.f32 0.0, %v394
  %396 = vmatmul.bf16.gmra.mxu0 %v232
  %v397 = vpop.f32.mrf.mxu0
  %v398 = vadd.f32 0.0, %v397
  %v399 = vpop.f32.mrf.mxu0
  %v400 = vadd.f32 0.0, %v399
  %401 = vmatmul.bf16.gmra.mxu0 %v233
  %v402 = vpop.f32.mrf.mxu0
  %v403 = vadd.f32 0.0, %v402
  %v404 = vpop.f32.mrf.mxu0
  %v405 = vadd.f32 0.0, %v404
  %406 = vmatmul.bf16.gmra.mxu0 %v234
  %v407 = vpop.f32.mrf.mxu0
  %v408 = vadd.f32 0.0, %v407
  %v409 = vpop.f32.mrf.mxu0
  %v410 = vadd.f32 0.0, %v409
  %411 = vmatmul.bf16.gmra.mxu0 %v235
  %v412 = vpop.f32.mrf.mxu0
  %v413 = vadd.f32 0.0, %v412
  %v414 = vpop.f32.mrf.mxu0
  %v415 = vadd.f32 0.0, %v414
  %416 = vmatmul.bf16.gmra.mxu0 %v236
  %v417 = vpop.f32.mrf.mxu0
  %v418 = vadd.f32 0.0, %v417
  %v419 = vpop.f32.mrf.mxu0
  %v420 = vadd.f32 0.0, %v419
  %421 = vmatmul.bf16.gmra.mxu0 %v237
  %v422 = vpop.f32.mrf.mxu0
  %v423 = vadd.f32 0.0, %v422
  %v424 = vpop.f32.mrf.mxu0
  %v425 = vadd.f32 0.0, %v424
  %426 = vmatmul.bf16.gmra.mxu0 %v238
  %v427 = vpop.f32.mrf.mxu0
  %v428 = vadd.f32 0.0, %v427
  %v429 = vpop.f32.mrf.mxu0
  %v430 = vadd.f32 0.0, %v429
  %431 = vmatmul.bf16.gmra.mxu0 %v239
  %v432 = vpop.f32.mrf.mxu0
  %v433 = vadd.f32 0.0, %v432
  %v434 = vpop.f32.mrf.mxu0
  %v435 = vadd.f32 0.0, %v434
  %436 = vmatmul.bf16.gmra.mxu0 %v240
  %v437 = vpop.f32.mrf.mxu0
  %v438 = vadd.f32 0.0, %v437
  %v439 = vpop.f32.mrf.mxu0
  %v440 = vadd.f32 0.0, %v439
  %441 = vmatmul.bf16.gmra.mxu0 %v241
  %v442 = vpop.f32.mrf.mxu0
  %v443 = vadd.f32 0.0, %v442
  %v444 = vpop.f32.mrf.mxu0
  %v445 = vadd.f32 0.0, %v444
  %446 = vmatmul.bf16.gmra.mxu0 %v242
  %v447 = vpop.f32.mrf.mxu0
  %v448 = vadd.f32 0.0, %v447
  %v449 = vpop.f32.mrf.mxu0
  %v450 = vadd.f32 0.0, %v449
  %451 = vmatmul.bf16.gmra.mxu0 %v243
  %v452 = vpop.f32.mrf.mxu0
  %v453 = vadd.f32 0.0, %v452
  %v454 = vpop.f32.mrf.mxu0
  %v455 = vadd.f32 0.0, %v454
  %456 = vmatmul.bf16.gmra.mxu0 %v244
  %v457 = vpop.f32.mrf.mxu0
  %v458 = vadd.f32 0.0, %v457
  %v459 = vpop.f32.mrf.mxu0
  %v460 = vadd.f32 0.0, %v459
  %461 = vmatmul.bf16.gmra.mxu0 %v245
  %v462 = vpop.f32.mrf.mxu0
  %v463 = vadd.f32 0.0, %v462
  %v464 = vpop.f32.mrf.mxu0
  %v465 = vadd.f32 0.0, %v464
  %466 = vmatmul.bf16.gmra.mxu0 %v246
  %v467 = vpop.f32.mrf.mxu0
  %v468 = vadd.f32 0.0, %v467
  %v469 = vpop.f32.mrf.mxu0
  %v470 = vadd.f32 0.0, %v469
  %471 = vmatmul.bf16.gmra.mxu0 %v247
  %v472 = vpop.f32.mrf.mxu0
  %v473 = vadd.f32 0.0, %v472
  %v474 = vpop.f32.mrf.mxu0
  %v475 = vadd.f32 0.0, %v474
  %476 = vmatmul.bf16.gmra.mxu0 %v248
  %v477 = vpop.f32.mrf.mxu0
  %v478 = vadd.f32 0.0, %v477
  %v479 = vpop.f32.mrf.mxu0
  %v480 = vadd.f32 0.0, %v479
  %481 = vmatmul.bf16.gmra.mxu0 %v249
  %v482 = vpop.f32.mrf.mxu0
  %v483 = vadd.f32 0.0, %v482
  %v484 = vpop.f32.mrf.mxu0
  %v485 = vadd.f32 0.0, %v484
  %486 = vmatmul.bf16.gmra.mxu0 %v250
  %v487 = vpop.f32.mrf.mxu0
  %v488 = vadd.f32 0.0, %v487
  %v489 = vpop.f32.mrf.mxu0
  %v490 = vadd.f32 0.0, %v489
  %491 = vmatmul.bf16.gmra.mxu0 %v251
  %v492 = vpop.f32.mrf.mxu0
  %v493 = vadd.f32 0.0, %v492
  %v494 = vpop.f32.mrf.mxu0
  %v495 = vadd.f32 0.0, %v494
  %496 = vmatmul.bf16.gmra.mxu0 %v252
  %v497 = vpop.f32.mrf.mxu0
  %v498 = vadd.f32 0.0, %v497
  %v499 = vpop.f32.mrf.mxu0
  %v500 = vadd.f32 0.0, %v499
  %501 = vdwg.mxu0
  %v502 = vpack.c.bf16 %v343, %v343
  %v503 = vpack.c.bf16 %v345, %v345
  %v504 = vpack.c.bf16 %v348, %v348
  %v505 = vpack.c.bf16 %v350, %v350
  %v506 = vpack.c.bf16 %v353, %v353
  %v507 = vpack.c.bf16 %v355, %v355
  %v508 = vpack.c.bf16 %v358, %v358
  %v509 = vpack.c.bf16 %v360, %v360
  %v510 = vpack.c.bf16 %v363, %v363
  %v511 = vpack.c.bf16 %v365, %v365
  %v512 = vpack.c.bf16 %v368, %v368
  %v513 = vpack.c.bf16 %v370, %v370
  %v514 = vpack.c.bf16 %v373, %v373
  %v515 = vpack.c.bf16 %v375, %v375
  %v516 = vpack.c.bf16 %v378, %v378
  %v517 = vpack.c.bf16 %v380, %v380
  %v518 = vpack.c.bf16 %v383, %v383
  %v519 = vpack.c.bf16 %v385, %v385
  %v520 = vpack.c.bf16 %v388, %v388
  %v521 = vpack.c.bf16 %v390, %v390
  %v522 = vpack.c.bf16 %v393, %v393
  %v523 = vpack.c.bf16 %v395, %v395
  %v524 = vpack.c.bf16 %v398, %v398
  %v525 = vpack.c.bf16 %v400, %v400
  %v526 = vpack.c.bf16 %v403, %v403
  %v527 = vpack.c.bf16 %v405, %v405
  %v528 = vpack.c.bf16 %v408, %v408
  %v529 = vpack.c.bf16 %v410, %v410
  %v530 = vpack.c.bf16 %v413, %v413
  %v531 = vpack.c.bf16 %v415, %v415
  %v532 = vpack.c.bf16 %v418, %v418
  %v533 = vpack.c.bf16 %v420, %v420
  %v534 = vpack.c.bf16 %v423, %v423
  %v535 = vpack.c.bf16 %v425, %v425
  %v536 = vpack.c.bf16 %v428, %v428
  %v537 = vpack.c.bf16 %v430, %v430
  %v538 = vpack.c.bf16 %v433, %v433
  %v539 = vpack.c.bf16 %v435, %v435
  %v540 = vpack.c.bf16 %v438, %v438
  %v541 = vpack.c.bf16 %v440, %v440
  %v542 = vpack.c.bf16 %v443, %v443
  %v543 = vpack.c.bf16 %v445, %v445
  %v544 = vpack.c.bf16 %v448, %v448
  %v545 = vpack.c.bf16 %v450, %v450
  %v546 = vpack.c.bf16 %v453, %v453
  %v547 = vpack.c.bf16 %v455, %v455
  %v548 = vpack.c.bf16 %v458, %v458
  %v549 = vpack.c.bf16 %v460, %v460
  %v550 = vpack.c.bf16 %v463, %v463
  %v551 = vpack.c.bf16 %v465, %v465
  %v552 = vpack.c.bf16 %v468, %v468
  %v553 = vpack.c.bf16 %v470, %v470
  %v554 = vpack.c.bf16 %v473, %v473
  %v555 = vpack.c.bf16 %v475, %v475
  %v556 = vpack.c.bf16 %v478, %v478
  %v557 = vpack.c.bf16 %v480, %v480
  %v558 = vpack.c.bf16 %v483, %v483
  %v559 = vpack.c.bf16 %v485, %v485
  %v560 = vpack.c.bf16 %v488, %v488
  %v561 = vpack.c.bf16 %v490, %v490
  %v562 = vpack.c.bf16 %v493, %v493
  %v563 = vpack.c.bf16 %v495, %v495
  %v564 = vpack.c.bf16 %v498, %v498
  %v565 = vpack.c.bf16 %v500, %v500
  %566 = vst [vmem:[%s2] sm:$0xf] %v502
  %567 = vst [vmem:[%s2 + $0x4] sm:$0xf] %v503
  %568 = vst [vmem:[%s2 + $0x8] sm:$0xf] %v504
  %569 = vst [vmem:[%s2 + $0xc] sm:$0xf] %v505
  %570 = vst [vmem:[%s2 + $0x10] sm:$0xf] %v506
  %571 = vst [vmem:[%s2 + $0x14] sm:$0xf] %v507
  %572 = vst [vmem:[%s2 + $0x18] sm:$0xf] %v508
  %573 = vst [vmem:[%s2 + $0x1c] sm:$0xf] %v509
  %574 = vst [vmem:[%s2 + $0x20] sm:$0xf] %v510
  %575 = vst [vmem:[%s2 + $0x24] sm:$0xf] %v511
  %576 = vst [vmem:[%s2 + $0x28] sm:$0xf] %v512
  %577 = vst [vmem:[%s2 + $0x2c] sm:$0xf] %v513
  %578 = vst [vmem:[%s2 + $0x30] sm:$0xf] %v514
  %579 = vst [vmem:[%s2 + $0x34] sm:$0xf] %v515
  %580 = vst [vmem:[%s2 + $0x38] sm:$0xf] %v516
  %581 = vst [vmem:[%s2 + $0x3c] sm:$0xf] %v517
  %582 = vst [vmem:[%s2 + $0x40] sm:$0xf] %v518
  %583 = vst [vmem:[%s2 + $0x44] sm:$0xf] %v519
  %584 = vst [vmem:[%s2 + $0x48] sm:$0xf] %v520
  %585 = vst [vmem:[%s2 + $0x4c] sm:$0xf] %v521
  %586 = vst [vmem:[%s2 + $0x50] sm:$0xf] %v522
  %587 = vst [vmem:[%s2 + $0x54] sm:$0xf] %v523
  %588 = vst [vmem:[%s2 + $0x58] sm:$0xf] %v524
  %589 = vst [vmem:[%s2 + $0x5c] sm:$0xf] %v525
  %590 = vst [vmem:[%s2 + $0x60] sm:$0xf] %v526
  %591 = vst [vmem:[%s2 + $0x64] sm:$0xf] %v527
  %592 = vst [vmem:[%s2 + $0x68] sm:$0xf] %v528
  %593 = vst [vmem:[%s2 + $0x6c] sm:$0xf] %v529
  %594 = vst [vmem:[%s2 + $0x70] sm:$0xf] %v530
  %595 = vst [vmem:[%s2 + $0x74] sm:$0xf] %v531
  %596 = vst [vmem:[%s2 + $0x78] sm:$0xf] %v532
  %597 = vst [vmem:[%s2 + $0x7c] sm:$0xf] %v533
  %598 = vst [vmem:[%s2 + $0x80] sm:$0xf] %v534
  %599 = vst [vmem:[%s2 + $0x84] sm:$0xf] %v535
  %600 = vst [vmem:[%s2 + $0x88] sm:$0xf] %v536
  %601 = vst [vmem:[%s2 + $0x8c] sm:$0xf] %v537
  %602 = vst [vmem:[%s2 + $0x90] sm:$0xf] %v538
  %603 = vst [vmem:[%s2 + $0x94] sm:$0xf] %v539
  %604 = vst [vmem:[%s2 + $0x98] sm:$0xf] %v540
  %605 = vst [vmem:[%s2 + $0x9c] sm:$0xf] %v541
  %606 = vst [vmem:[%s2 + $0xa0] sm:$0xf] %v542
  %607 = vst [vmem:[%s2 + $0xa4] sm:$0xf] %v543
  %608 = vst [vmem:[%s2 + $0xa8] sm:$0xf] %v544
  %609 = vst [vmem:[%s2 + $0xac] sm:$0xf] %v545
  %610 = vst [vmem:[%s2 + $0xb0] sm:$0xf] %v546
  %611 = vst [vmem:[%s2 + $0xb4] sm:$0xf] %v547
  %612 = vst [vmem:[%s2 + $0xb8] sm:$0xf] %v548
  %613 = vst [vmem:[%s2 + $0xbc] sm:$0xf] %v549
  %614 = vst [vmem:[%s2 + $0xc0] sm:$0xf] %v550
  %615 = vst [vmem:[%s2 + $0xc4] sm:$0xf] %v551
  %616 = vst [vmem:[%s2 + $0xc8] sm:$0xf] %v552
  %617 = vst [vmem:[%s2 + $0xcc] sm:$0xf] %v553
  %618 = vst [vmem:[%s2 + $0xd0] sm:$0xf] %v554
  %619 = vst [vmem:[%s2 + $0xd4] sm:$0xf] %v555
  %620 = vst [vmem:[%s2 + $0xd8] sm:$0xf] %v556
  %621 = vst [vmem:[%s2 + $0xdc] sm:$0xf] %v557
  %622 = vst [vmem:[%s2 + $0xe0] sm:$0xf] %v558
  %623 = vst [vmem:[%s2 + $0xe4] sm:$0xf] %v559
  %624 = vst [vmem:[%s2 + $0xe8] sm:$0xf] %v560
  %625 = vst [vmem:[%s2 + $0xec] sm:$0xf] %v561
  %626 = vst [vmem:[%s2 + $0xf0] sm:$0xf] %v562
  %627 = vst [vmem:[%s2 + $0xf4] sm:$0xf] %v563
  %628 = vst [vmem:[%s2 + $0xf8] sm:$0xf] %v564
  %629 = vst [vmem:[%s2 + $0xfc] sm:$0xf] %v565
  %p630 = scmp.eq.s32.totalorder 0, 0
  // Predicated region
  $region10: #{gen_block_forward.2} parent=0 // pred_check
    %p631 = pneg %p630
  $region11: #{gen_block_forward.2} parent=0 // pred_check_branch
    %633 = sbr.rel (%p631) target = $region13
  $region12: #{gen_block_forward.2} parent=0 // pred_region
    %634 = vst [vmem:[%s3] sm:$0x3] 0.0
  $region13: #{gen_block_forward.2} parent=0 // pred_fallthru
    _
  %v635 = vld [vmem:[%s3] sm:$0x1]
  %v636 = vadd.f32 %v343, %v345
  %v637 = vadd.f32 %v636, %v348
  %v638 = vadd.f32 %v637, %v350
  %v639 = vadd.f32 %v638, %v353
  %v640 = vadd.f32 %v639, %v355
  %v641 = vadd.f32 %v640, %v358
  %v642 = vadd.f32 %v641, %v360
  %v643 = vadd.f32 %v642, %v363
  %v644 = vadd.f32 %v643, %v365
  %v645 = vadd.f32 %v644, %v368
  %v646 = vadd.f32 %v645, %v370
  %v647 = vadd.f32 %v646, %v373
  %v648 = vadd.f32 %v647, %v375
  %v649 = vadd.f32 %v648, %v378
  %v650 = vadd.f32 %v649, %v380
  %v651 = vadd.f32 %v650, %v383
  %v652 = vadd.f32 %v651, %v385
  %v653 = vadd.f32 %v652, %v388
  %v654 = vadd.f32 %v653, %v390
  %v655 = vadd.f32 %v654, %v393
  %v656 = vadd.f32 %v655, %v395
  %v657 = vadd.f32 %v656, %v398
  %v658 = vadd.f32 %v657, %v400
  %v659 = vadd.f32 %v658, %v403
  %v660 = vadd.f32 %v659, %v405
  %v661 = vadd.f32 %v660, %v408
  %v662 = vadd.f32 %v661, %v410
  %v663 = vadd.f32 %v662, %v413
  %v664 = vadd.f32 %v663, %v415
  %v665 = vadd.f32 %v664, %v418
  %v666 = vadd.f32 %v665, %v420
  %v667 = vadd.f32 %v666, %v423
  %v668 = vadd.f32 %v667, %v425
  %v669 = vadd.f32 %v668, %v428
  %v670 = vadd.f32 %v669, %v430
  %v671 = vadd.f32 %v670, %v433
  %v672 = vadd.f32 %v671, %v435
  %v673 = vadd.f32 %v672, %v438
  %v674 = vadd.f32 %v673, %v440
  %v675 = vadd.f32 %v674, %v443
  %v676 = vadd.f32 %v675, %v445
  %v677 = vadd.f32 %v676, %v448
  %v678 = vadd.f32 %v677, %v450
  %v679 = vadd.f32 %v678, %v453
  %v680 = vadd.f32 %v679, %v455
  %v681 = vadd.f32 %v680, %v458
  %v682 = vadd.f32 %v681, %v460
  %v683 = vadd.f32 %v682, %v463
  %v684 = vadd.f32 %v683, %v465
  %v685 = vadd.f32 %v684, %v468
  %v686 = vadd.f32 %v685, %v470
  %v687 = vadd.f32 %v686, %v473
  %v688 = vadd.f32 %v687, %v475
  %v689 = vadd.f32 %v688, %v478
  %v690 = vadd.f32 %v689, %v480
  %v691 = vadd.f32 %v690, %v483
  %v692 = vadd.f32 %v691, %v485
  %v693 = vadd.f32 %v692, %v488
  %v694 = vadd.f32 %v693, %v490
  %v695 = vadd.f32 %v694, %v493
  %v696 = vadd.f32 %v695, %v495
  %v697 = vadd.f32 %v696, %v498
  %v698 = vadd.f32 %v697, %v500
  %v699 = vrot.slane %v698, 4
  %v700 = vadd.f32 %v698, %v699
  %v701 = vrot.slane %v700, 2
  %v702 = vadd.f32 %v700, %v701
  %v703 = vrot.slane %v702, 1
  %v704 = vadd.f32 %v702, %v703
  %v705 = vadd.f32 %v635, %v704
  %706 = vst [vmem:[%s3] sm:$0x1] %v705
  %v707 = vld [vmem:[%s3 + $0x1] sm:$0x1]
  %v708 = vmul.f32 %v343, %v343
  %v709 = vmul.f32 %v345, %v345
  %v710 = vmul.f32 %v348, %v348
  %v711 = vmul.f32 %v350, %v350
  %v712 = vmul.f32 %v353, %v353
  %v713 = vmul.f32 %v355, %v355
  %v714 = vmul.f32 %v358, %v358
  %v715 = vmul.f32 %v360, %v360
  %v716 = vmul.f32 %v363, %v363
  %v717 = vmul.f32 %v365, %v365
  %v718 = vmul.f32 %v368, %v368
  %v719 = vmul.f32 %v370, %v370
  %v720 = vmul.f32 %v373, %v373
  %v721 = vmul.f32 %v375, %v375
  %v722 = vmul.f32 %v378, %v378
  %v723 = vmul.f32 %v380, %v380
  %v724 = vmul.f32 %v383, %v383
  %v725 = vmul.f32 %v385, %v385
  %v726 = vmul.f32 %v388, %v388
  %v727 = vmul.f32 %v390, %v390
  %v728 = vmul.f32 %v393, %v393
  %v729 = vmul.f32 %v395, %v395
  %v730 = vmul.f32 %v398, %v398
  %v731 = vmul.f32 %v400, %v400
  %v732 = vmul.f32 %v403, %v403
  %v733 = vmul.f32 %v405, %v405
  %v734 = vmul.f32 %v408, %v408
  %v735 = vmul.f32 %v410, %v410
  %v736 = vmul.f32 %v413, %v413
  %v737 = vmul.f32 %v415, %v415
  %v738 = vmul.f32 %v418, %v418
  %v739 = vmul.f32 %v420, %v420
  %v740 = vmul.f32 %v423, %v423
  %v741 = vmul.f32 %v425, %v425
  %v742 = vmul.f32 %v428, %v428
  %v743 = vmul.f32 %v430, %v430
  %v744 = vmul.f32 %v433, %v433
  %v745 = vmul.f32 %v435, %v435
  %v746 = vmul.f32 %v438, %v438
  %v747 = vmul.f32 %v440, %v440
  %v748 = vmul.f32 %v443, %v443
  %v749 = vmul.f32 %v445, %v445
  %v750 = vmul.f32 %v448, %v448
  %v751 = vmul.f32 %v450, %v450
  %v752 = vmul.f32 %v453, %v453
  %v753 = vmul.f32 %v455, %v455
  %v754 = vmul.f32 %v458, %v458
  %v755 = vmul.f32 %v460, %v460
  %v756 = vmul.f32 %v463, %v463
  %v757 = vmul.f32 %v465, %v465
  %v758 = vmul.f32 %v468, %v468
  %v759 = vmul.f32 %v470, %v470
  %v760 = vmul.f32 %v473, %v473
  %v761 = vmul.f32 %v475, %v475
  %v762 = vmul.f32 %v478, %v478
  %v763 = vmul.f32 %v480, %v480
  %v764 = vmul.f32 %v483, %v483
  %v765 = vmul.f32 %v485, %v485
  %v766 = vmul.f32 %v488, %v488
  %v767 = vmul.f32 %v490, %v490
  %v768 = vmul.f32 %v493, %v493
  %v769 = vmul.f32 %v495, %v495
  %v770 = vmul.f32 %v498, %v498
  %v771 = vmul.f32 %v500, %v500
  %v772 = vadd.f32 %v708, %v709
  %v773 = vadd.f32 %v772, %v710
  %v774 = vadd.f32 %v773, %v711
  %v775 = vadd.f32 %v774, %v712
  %v776 = vadd.f32 %v775, %v713
  %v777 = vadd.f32 %v776, %v714
  %v778 = vadd.f32 %v777, %v715
  %v779 = vadd.f32 %v778, %v716
  %v780 = vadd.f32 %v779, %v717
  %v781 = vadd.f32 %v780, %v718
  %v782 = vadd.f32 %v781, %v719
  %v783 = vadd.f32 %v782, %v720
  %v784 = vadd.f32 %v783, %v721
  %v785 = vadd.f32 %v784, %v722
  %v786 = vadd.f32 %v785, %v723
  %v787 = vadd.f32 %v786, %v724
  %v788 = vadd.f32 %v787, %v725
  %v789 = vadd.f32 %v788, %v726
  %v790 = vadd.f32 %v789, %v727
  %v791 = vadd.f32 %v790, %v728
  %v792 = vadd.f32 %v791, %v729
  %v793 = vadd.f32 %v792, %v730
  %v794 = vadd.f32 %v793, %v731
  %v795 = vadd.f32 %v794, %v732
  %v796 = vadd.f32 %v795, %v733
  %v797 = vadd.f32 %v796, %v734
  %v798 = vadd.f32 %v797, %v735
  %v799 = vadd.f32 %v798, %v736
  %v800 = vadd.f32 %v799, %v737
  %v801 = vadd.f32 %v800, %v738
  %v802 = vadd.f32 %v801, %v739
  %v803 = vadd.f32 %v802, %v740
  %v804 = vadd.f32 %v803, %v741
  %v805 = vadd.f32 %v804, %v742
  %v806 = vadd.f32 %v805, %v743
  %v807 = vadd.f32 %v806, %v744
  %v808 = vadd.f32 %v807, %v745
  %v809 = vadd.f32 %v808, %v746
  %v810 = vadd.f32 %v809, %v747
  %v811 = vadd.f32 %v810, %v748
  %v812 = vadd.f32 %v811, %v749
  %v813 = vadd.f32 %v812, %v750
  %v814 = vadd.f32 %v813, %v751
  %v815 = vadd.f32 %v814, %v752
  %v816 = vadd.f32 %v815, %v753
  %v817 = vadd.f32 %v816, %v754
  %v818 = vadd.f32 %v817, %v755
  %v819 = vadd.f32 %v818, %v756
  %v820 = vadd.f32 %v819, %v757
  %v821 = vadd.f32 %v820, %v758
  %v822 = vadd.f32 %v821, %v759
  %v823 = vadd.f32 %v822, %v760
  %v824 = vadd.f32 %v823, %v761
  %v825 = vadd.f32 %v824, %v762
  %v826 = vadd.f32 %v825, %v763
  %v827 = vadd.f32 %v826, %v764
  %v828 = vadd.f32 %v827, %v765
  %v829 = vadd.f32 %v828, %v766
  %v830 = vadd.f32 %v829, %v767
  %v831 = vadd.f32 %v830, %v768
  %v832 = vadd.f32 %v831, %v769
  %v833 = vadd.f32 %v832, %v770
  %v834 = vadd.f32 %v833, %v771
  %v835 = vrot.slane %v834, 4
  %v836 = vadd.f32 %v834, %v835
  %v837 = vrot.slane %v836, 2
  %v838 = vadd.f32 %v836, %v837
  %v839 = vrot.slane %v838, 1
  %v840 = vadd.f32 %v838, %v839
  %v841 = vadd.f32 %v707, %v840
  %842 = vst [vmem:[%s3 + $0x1] sm:$0x1] %v841
  // Predicated region
  $region14: #{gen_block_forward.2} parent=0 // pred_check
    _
  $region15: #{gen_block_forward.2} parent=0 // pred_check_branch
    %844 = sbr.rel (0) target = $region17
  $region16: #{gen_block_forward.2} parent=0 // pred_region
    _
  $region17: #{gen_block_forward.2} parent=0 // pred_fallthru
    _
  // Predicated region
  $region18: #{gen_block_forward.2} parent=0 // pred_check
    _
  $region19: #{gen_block_forward.2} parent=0 // pred_check_branch
    %846 = sbr.rel (0) target = $region21
  $region20: #{gen_block_forward.2} parent=0 // pred_region
    _
  $region21: #{gen_block_forward.2} parent=0 // pred_fallthru
    _
  // Predicated region
  $region22: #{gen_block_forward.2} parent=0 // pred_check
    _
  $region23: #{gen_block_forward.2} parent=0 // pred_check_branch
    %848 = sbr.rel (0) target = $region25
  $region24: #{gen_block_forward.2} parent=0 // pred_region
    _
  $region25: #{gen_block_forward.2} parent=0 // pred_fallthru
    _
  // Predicated region
  $region26: #{gen_block_forward.2} parent=0 // pred_check
    _
  $region27: #{gen_block_forward.2} parent=0 // pred_check_branch
    %850 = sbr.rel (0) target = $region29
  $region28: #{gen_block_forward.2} parent=0 // pred_region
    _
  $region29: #{gen_block_forward.2} parent=0 // pred_fallthru
    _

// kernel: squeeze.34
$region0: #{squeeze.34}
  %s0 = inlined_call_operand.vmem [shape: f32[32], index: 0, kind: input, shape index: {}]
  %s1 = inlined_call_operand.vmem [shape: f32[4,8], index: 1, kind: output, shape index: {}]
  $region1: #{squeeze.34} parent=0
    #allocation0 [shape = 'u8[4096]{0}', space=vmem, size = 0x1000, scoped, tag = 'scoped mem for output reshape']
    #allocation1 [shape = 'u8[4096]{0}', space=vmem, size = 0x1000, scoped, tag = 'scoped mem for input reshape']
    %s3 = ssub.s32 2, 1
    %v4 = vld [vmem:[%s0] sm:%s3]
    %5 = vst [vmem:[#allocation1] sm:%s3] %v4
    %v6 = vld [vmem:[#allocation1] sm:$0x1]
    %vm7 = vcmask 64512
    %8 = vst.msk [vmem:[#allocation0] sm:$0x1] %vm7, %v6
    %v9 = vld [vmem:[#allocation1] sm:$0x1]
    %10 = vrot.lane.b32.xlu0 %v9, 120
    %v11 = vpop.permute.xlu0 %10
    %vm12 = vcmask 64512
    %s13 = scalar_lea.vmem [#allocation0], 1
    %14 = vst.msk [vmem:[%s13] sm:$0x1] %vm12, %v11
    %v15 = vld [vmem:[#allocation1] sm:$0x1]
    %16 = vrot.lane.b32.xlu0 %v15, 112
    %v17 = vpop.permute.xlu0 %16
    %vm18 = vcmask 64512
    %s19 = scalar_lea.vmem [#allocation0], 2
    %20 = vst.msk [vmem:[%s19] sm:$0x1] %vm18, %v17
    %v21 = vld [vmem:[#allocation1] sm:$0x1]
    %22 = vrot.lane.b32.xlu0 %v21, 104
    %v23 = vpop.permute.xlu0 %22
    %vm24 = vcmask 64512
    %s25 = scalar_lea.vmem [#allocation0], 3
    %26 = vst.msk [vmem:[%s25] sm:$0x1] %vm24, %v23
    %s28 = ssub.s32 16, 1
    %v29 = vld [vmem:[#allocation0] sm:%s28]
    %s31 = ssub.s32 16, 1
    %32 = vst [vmem:[%s1] sm:%s31] %v29

// kernel: tile.18
$region0: #{tile.18}
  #allocation0 [shape = 's32[1]{0}', space=sflag, size = 0x4, scoped, tag = 'scoped memory for tile.18']
  %s0 = inlined_call_operand.vmem [shape: f32[8], index: 0, kind: input, shape index: {}]
  %s1 = inlined_call_operand.vmem [shape: f32[4,8], index: 1, kind: output, shape index: {}]
  // Predicated region
  $region2: #{tile.18} parent=0 // pred_check
    _
  $region3: #{tile.18} parent=0 // pred_check_branch
    %3 = sbr.rel (0) target = $region5
  $region4: #{tile.18} parent=0 // pred_region
    _
  $region5: #{tile.18} parent=0 // pred_fallthru
    _
  %v4 = vld [vmem:[%s0] ss:$0 sm:$0xff]
  %5 = vst [vmem:[%s1] sm:$0xf] %v4

// kernel: gen_block_forward.2
$region0: #{gen_block_forward.2}
  #allocation0 [shape = 'u32[]', space=smem, size = 0x4, offset = 0x4, fixed_abs, tag = 'smem constant byte address 0x4 - core index']
  #allocation1 [shape = 'u32[72,128]{1,0:T(1,128)}', space=vmem, size = 0x9000, scoped, tag = 'internal scratch']
  %s0 = inlined_call_operand.vmem [shape: bf16[512,128], index: 0, kind: input, shape index: {}]
  %s1 = inlined_call_operand.vmem [shape: bf16[128,128], index: 1, kind: input, shape index: {}]
  %s2 = inlined_call_operand.vmem [shape: bf16[512,128], index: 2, kind: output, shape index: {0}]
  %s3 = inlined_call_operand.vmem [shape: f32[2,128], index: 3, kind: output, shape index: {1}]
  %4 = xla_tuple %s2, %s3
  %s5 = sld [smem:[#allocation0]]
  $region30: #{gen_block_forward.2} parent=0
    _
  %s7 = ssub.s32 1, %s5
  %s8 = scalar_select 0, %s7, %s5
  // Predicated region
  $region2: #{gen_block_forward.2} parent=0 // pred_check
    _
  $region3: #{gen_block_forward.2} parent=0 // pred_check_branch
    %10 = sbr.rel (0) target = $region5
  $region4: #{gen_block_forward.2} parent=0 // pred_region
    _
  $region5: #{gen_block_forward.2} parent=0 // pred_fallthru
    _
  // Predicated region
  $region6: #{gen_block_forward.2} parent=0 // pred_check
    _
  $region7: #{gen_block_forward.2} parent=0 // pred_check_branch
    %12 = sbr.rel (0) target = $region9
  $region8: #{gen_block_forward.2} parent=0 // pred_region
    _
  $region9: #{gen_block_forward.2} parent=0 // pred_fallthru
    _
  %v13 = vld [vmem:[%s0] sm:$0xf]
  %v14 = vld [vmem:[%s0 + $0x4] sm:$0xf]
  %v15 = vld [vmem:[%s0 + $0x8] sm:$0xf]
  %v16 = vld [vmem:[%s0 + $0xc] sm:$0xf]
  %v17 = vld [vmem:[%s0 + $0x10] sm:$0xf]
  %v18 = vld [vmem:[%s0 + $0x14] sm:$0xf]
  %v19 = vld [vmem:[%s0 + $0x18] sm:$0xf]
  %v20 = vld [vmem:[%s0 + $0x1c] sm:$0xf]
  %v21 = vld [vmem:[%s0 + $0x20] sm:$0xf]
  %v22 = vld [vmem:[%s0 + $0x24] sm:$0xf]
  %v23 = vld [vmem:[%s0 + $0x28] sm:$0xf]
  %v24 = vld [vmem:[%s0 + $0x2c] sm:$0xf]
  %v25 = vld [vmem:[%s0 + $0x30] sm:$0xf]
  %v26 = vld [vmem:[%s0 + $0x34] sm:$0xf]
  %v27 = vld [vmem:[%s0 + $0x38] sm:$0xf]
  %v28 = vld [vmem:[%s0 + $0x3c] sm:$0xf]
  %v29 = vld [vmem:[%s0 + $0x40] sm:$0xf]
  %v30 = vld [vmem:[%s0 + $0x44] sm:$0xf]
  %v31 = vld [vmem:[%s0 + $0x48] sm:$0xf]
  %v32 = vld [vmem:[%s0 + $0x4c] sm:$0xf]
  %v33 = vld [vmem:[%s0 + $0x50] sm:$0xf]
  %v34 = vld [vmem:[%s0 + $0x54] sm:$0xf]
  %v35 = vld [vmem:[%s0 + $0x58] sm:$0xf]
  %v36 = vld [vmem:[%s0 + $0x5c] sm:$0xf]
  %v37 = vld [vmem:[%s0 + $0x60] sm:$0xf]
  %v38 = vld [vmem:[%s0 + $0x64] sm:$0xf]
  %v39 = vld [vmem:[%s0 + $0x68] sm:$0xf]
  %v40 = vld [vmem:[%s0 + $0x6c] sm:$0xf]
  %v41 = vld [vmem:[%s0 + $0x70] sm:$0xf]
  %v42 = vld [vmem:[%s0 + $0x74] sm:$0xf]
  %v43 = vld [vmem:[%s0 + $0x78] sm:$0xf]
  %v44 = vld [vmem:[%s0 + $0x7c] sm:$0xf]
  %v45 = vld [vmem:[%s0 + $0x80] sm:$0xf]
  %v46 = vld [vmem:[%s0 + $0x84] sm:$0xf]
  %v47 = vld [vmem:[%s0 + $0x88] sm:$0xf]
  %v48 = vld [vmem:[%s0 + $0x8c] sm:$0xf]
  %v49 = vld [vmem:[%s0 + $0x90] sm:$0xf]
  %v50 = vld [vmem:[%s0 + $0x94] sm:$0xf]
  %v51 = vld [vmem:[%s0 + $0x98] sm:$0xf]
  %v52 = vld [vmem:[%s0 + $0x9c] sm:$0xf]
  %v53 = vld [vmem:[%s0 + $0xa0] sm:$0xf]
  %v54 = vld [vmem:[%s0 + $0xa4] sm:$0xf]
  %v55 = vld [vmem:[%s0 + $0xa8] sm:$0xf]
  %v56 = vld [vmem:[%s0 + $0xac] sm:$0xf]
  %v57 = vld [vmem:[%s0 + $0xb0] sm:$0xf]
  %v58 = vld [vmem:[%s0 + $0xb4] sm:$0xf]
  %v59 = vld [vmem:[%s0 + $0xb8] sm:$0xf]
  %v60 = vld [vmem:[%s0 + $0xbc] sm:$0xf]
  %v61 = vld [vmem:[%s0 + $0xc0] sm:$0xf]
  %v62 = vld [vmem:[%s0 + $0xc4] sm:$0xf]
  %v63 = vld [vmem:[%s0 + $0xc8] sm:$0xf]
  %v64 = vld [vmem:[%s0 + $0xcc] sm:$0xf]
  %v65 = vld [vmem:[%s0 + $0xd0] sm:$0xf]
  %v66 = vld [vmem:[%s0 + $0xd4] sm:$0xf]
  %v67 = vld [vmem:[%s0 + $0xd8] sm:$0xf]
  %v68 = vld [vmem:[%s0 + $0xdc] sm:$0xf]
  %v69 = vld [vmem:[%s0 + $0xe0] sm:$0xf]
  %v70 = vld [vmem:[%s0 + $0xe4] sm:$0xf]
  %v71 = vld [vmem:[%s0 + $0xe8] sm:$0xf]
  %v72 = vld [vmem:[%s0 + $0xec] sm:$0xf]
  %v73 = vld [vmem:[%s0 + $0xf0] sm:$0xf]
  %v74 = vld [vmem:[%s0 + $0xf4] sm:$0xf]
  %v75 = vld [vmem:[%s0 + $0xf8] sm:$0xf]
  %v76 = vld [vmem:[%s0 + $0xfc] sm:$0xf]
  %v77 = vld [vmem:[%s1] sm:$0xf]
  %v78 = vld [vmem:[%s1 + $0x4] sm:$0xf]
  %v79 = vld [vmem:[%s1 + $0x8] sm:$0xf]
  %v80 = vld [vmem:[%s1 + $0xc] sm:$0xf]
  %v81 = vld [vmem:[%s1 + $0x10] sm:$0xf]
  %v82 = vld [vmem:[%s1 + $0x14] sm:$0xf]
  %v83 = vld [vmem:[%s1 + $0x18] sm:$0xf]
  %v84 = vld [vmem:[%s1 + $0x1c] sm:$0xf]
  %v85 = vld [vmem:[%s1 + $0x20] sm:$0xf]
  %v86 = vld [vmem:[%s1 + $0x24] sm:$0xf]
  %v87 = vld [vmem:[%s1 + $0x28] sm:$0xf]
  %v88 = vld [vmem:[%s1 + $0x2c] sm:$0xf]
  %v89 = vld [vmem:[%s1 + $0x30] sm:$0xf]
  %v90 = vld [vmem:[%s1 + $0x34] sm:$0xf]
  %v91 = vld [vmem:[%s1 + $0x38] sm:$0xf]
  %v92 = vld [vmem:[%s1 + $0x3c] sm:$0xf]
  %v157 = vunpack.c.l.b16 %v13
  %v158 = vunpack.c.l.b16 %v14
  %v159 = vunpack.c.l.b16 %v15
  %v160 = vunpack.c.l.b16 %v16
  %v161 = vunpack.c.l.b16 %v17
  %v162 = vunpack.c.l.b16 %v18
  %v163 = vunpack.c.l.b16 %v19
  %v164 = vunpack.c.l.b16 %v20
  %v165 = vunpack.c.l.b16 %v21
  %v166 = vunpack.c.l.b16 %v22
  %v167 = vunpack.c.l.b16 %v23
  %v168 = vunpack.c.l.b16 %v24
  %v169 = vunpack.c.l.b16 %v25
  %v170 = vunpack.c.l.b16 %v26
  %v171 = vunpack.c.l.b16 %v27
  %v172 = vunpack.c.l.b16 %v28
  %v173 = vunpack.c.l.b16 %v29
  %v174 = vunpack.c.l.b16 %v30
  %v175 = vunpack.c.l.b16 %v31
  %v176 = vunpack.c.l.b16 %v32
  %v177 = vunpack.c.l.b16 %v33
  %v178 = vunpack.c.l.b16 %v34
  %v179 = vunpack.c.l.b16 %v35
  %v180 = vunpack.c.l.b16 %v36
  %v181 = vunpack.c.l.b16 %v37
  %v182 = vunpack.c.l.b16 %v38
  %v183 = vunpack.c.l.b16 %v39
  %v184 = vunpack.c.l.b16 %v40
  %v185 = vunpack.c.l.b16 %v41
  %v186 = vunpack.c.l.b16 %v42
  %v187 = vunpack.c.l.b16 %v43
  %v188 = vunpack.c.l.b16 %v44
  %v189 = vunpack.c.l.b16 %v45
  %v190 = vunpack.c.l.b16 %v46
  %v191 = vunpack.c.l.b16 %v47
  %v192 = vunpack.c.l.b16 %v48
  %v193 = vunpack.c.l.b16 %v49
  %v194 = vunpack.c.l.b16 %v50
  %v195 = vunpack.c.l.b16 %v51
  %v196 = vunpack.c.l.b16 %v52
  %v197 = vunpack.c.l.b16 %v53
  %v198 = vunpack.c.l.b16 %v54
  %v199 = vunpack.c.l.b16 %v55
  %v200 = vunpack.c.l.b16 %v56
  %v201 = vunpack.c.l.b16 %v57
  %v202 = vunpack.c.l.b16 %v58
  %v203 = vunpack.c.l.b16 %v59
  %v204 = vunpack.c.l.b16 %v60
  %v205 = vunpack.c.l.b16 %v61
  %v206 = vunpack.c.l.b16 %v62
  %v207 = vunpack.c.l.b16 %v63
  %v208 = vunpack.c.l.b16 %v64
  %v209 = vunpack.c.l.b16 %v65
  %v210 = vunpack.c.l.b16 %v66
  %v211 = vunpack.c.l.b16 %v67
  %v212 = vunpack.c.l.b16 %v68
  %v213 = vunpack.c.l.b16 %v69
  %v214 = vunpack.c.l.b16 %v70
  %v215 = vunpack.c.l.b16 %v71
  %v216 = vunpack.c.l.b16 %v72
  %v217 = vunpack.c.l.b16 %v73
  %v218 = vunpack.c.l.b16 %v74
  %v219 = vunpack.c.l.b16 %v75
  %v220 = vunpack.c.l.b16 %v76
  %v221 = vpack.c.b16 %v158, %v157
  %v222 = vpack.c.b16 %v160, %v159
  %v223 = vpack.c.b16 %v162, %v161
  %v224 = vpack.c.b16 %v164, %v163
  %v225 = vpack.c.b16 %v166, %v165
  %v226 = vpack.c.b16 %v168, %v167
  %v227 = vpack.c.b16 %v170, %v169
  %v228 = vpack.c.b16 %v172, %v171
  %v229 = vpack.c.b16 %v174, %v173
  %v230 = vpack.c.b16 %v176, %v175
  %v231 = vpack.c.b16 %v178, %v177
  %v232 = vpack.c.b16 %v180, %v179
  %v233 = vpack.c.b16 %v182, %v181
  %v234 = vpack.c.b16 %v184, %v183
  %v235 = vpack.c.b16 %v186, %v185
  %v236 = vpack.c.b16 %v188, %v187
  %v237 = vpack.c.b16 %v190, %v189
  %v238 = vpack.c.b16 %v192, %v191
  %v239 = vpack.c.b16 %v194, %v193
  %v240 = vpack.c.b16 %v196, %v195
  %v241 = vpack.c.b16 %v198, %v197
  %v242 = vpack.c.b16 %v200, %v199
  %v243 = vpack.c.b16 %v202, %v201
  %v244 = vpack.c.b16 %v204, %v203
  %v245 = vpack.c.b16 %v206, %v205
  %v246 = vpack.c.b16 %v208, %v207
  %v247 = vpack.c.b16 %v210, %v209
  %v248 = vpack.c.b16 %v212, %v211
  %v249 = vpack.c.b16 %v214, %v213
  %v250 = vpack.c.b16 %v216, %v215
  %v251 = vpack.c.b16 %v218, %v217
  %v252 = vpack.c.b16 %v220, %v219
  %v301 = vunpack.c.l.b16 %v77
  %v302 = vunpack.c.l.b16 %v78
  %v303 = vunpack.c.l.b16 %v79
  %v304 = vunpack.c.l.b16 %v80
  %v305 = vunpack.c.l.b16 %v81
  %v306 = vunpack.c.l.b16 %v82
  %v307 = vunpack.c.l.b16 %v83
  %v308 = vunpack.c.l.b16 %v84
  %v309 = vunpack.c.l.b16 %v85
  %v310 = vunpack.c.l.b16 %v86
  %v311 = vunpack.c.l.b16 %v87
  %v312 = vunpack.c.l.b16 %v88
  %v313 = vunpack.c.l.b16 %v89
  %v314 = vunpack.c.l.b16 %v90
  %v315 = vunpack.c.l.b16 %v91
  %v316 = vunpack.c.l.b16 %v92
  %v317 = vpack.c.b16 %v302, %v301
  %v318 = vpack.c.b16 %v304, %v303
  %v319 = vpack.c.b16 %v306, %v305
  %v320 = vpack.c.b16 %v308, %v307
  %v321 = vpack.c.b16 %v310, %v309
  %v322 = vpack.c.b16 %v312, %v311
  %v323 = vpack.c.b16 %v314, %v313
  %v324 = vpack.c.b16 %v316, %v315
  %333 = vmatpush.bf16.msra.mxu0 %v324
  %334 = vmatpush.bf16.msra.mxu0 %v323
  %335 = vmatpush.bf16.msra.mxu0 %v322
  %336 = vmatpush.bf16.msra.mxu0 %v321
  %337 = vmatpush.bf16.msra.mxu0 %v320
  %338 = vmatpush.bf16.msra.mxu0 %v319
  %339 = vmatpush.bf16.msra.mxu0 %v318
  %340 = vmatpush.bf16.msra.mxu0 %v317
  %341 = vmatmul.bf16.gmra.mxu0 %v221
  %v342 = vpop.f32.mrf.mxu0
  %v343 = vadd.f32 0.0, %v342
  %v344 = vpop.f32.mrf.mxu0
  %v345 = vadd.f32 0.0, %v344
  %346 = vmatmul.bf16.gmra.mxu0 %v222
  %v347 = vpop.f32.mrf.mxu0
  %v348 = vadd.f32 0.0, %v347
  %v349 = vpop.f32.mrf.mxu0
  %v350 = vadd.f32 0.0, %v349
  %351 = vmatmul.bf16.gmra.mxu0 %v223
  %v352 = vpop.f32.mrf.mxu0
  %v353 = vadd.f32 0.0, %v352
  %v354 = vpop.f32.mrf.mxu0
  %v355 = vadd.f32 0.0, %v354
  %356 = vmatmul.bf16.gmra.mxu0 %v224
  %v357 = vpop.f32.mrf.mxu0
  %v358 = vadd.f32 0.0, %v357
  %v359 = vpop.f32.mrf.mxu0
  %v360 = vadd.f32 0.0, %v359
  %361 = vmatmul.bf16.gmra.mxu0 %v225
  %v362 = vpop.f32.mrf.mxu0
  %v363 = vadd.f32 0.0, %v362
  %v364 = vpop.f32.mrf.mxu0
  %v365 = vadd.f32 0.0, %v364
  %366 = vmatmul.bf16.gmra.mxu0 %v226
  %v367 = vpop.f32.mrf.mxu0
  %v368 = vadd.f32 0.0, %v367
  %v369 = vpop.f32.mrf.mxu0
  %v370 = vadd.f32 0.0, %v369
  %371 = vmatmul.bf16.gmra.mxu0 %v227
  %v372 = vpop.f32.mrf.mxu0
  %v373 = vadd.f32 0.0, %v372
  %v374 = vpop.f32.mrf.mxu0
  %v375 = vadd.f32 0.0, %v374
  %376 = vmatmul.bf16.gmra.mxu0 %v228
  %v377 = vpop.f32.mrf.mxu0
  %v378 = vadd.f32 0.0, %v377
  %v379 = vpop.f32.mrf.mxu0
  %v380 = vadd.f32 0.0, %v379
  %381 = vmatmul.bf16.gmra.mxu0 %v229
  %v382 = vpop.f32.mrf.mxu0
  %v383 = vadd.f32 0.0, %v382
  %v384 = vpop.f32.mrf.mxu0
  %v385 = vadd.f32 0.0, %v384
  %386 = vmatmul.bf16.gmra.mxu0 %v230
  %v387 = vpop.f32.mrf.mxu0
  %v388 = vadd.f32 0.0, %v387
  %v389 = vpop.f32.mrf.mxu0
  %v390 = vadd.f32 0.0, %v389
  %391 = vmatmul.bf16.gmra.mxu0 %v231
  %v392 = vpop.f32.mrf.mxu0
  %v393 = vadd.f32 0.0, %v392
  %v394 = vpop.f32.mrf.mxu0
  %v395 = vadd.f32 0.0, %v394
  %396 = vmatmul.bf16.gmra.mxu0 %v232
  %v397 = vpop.f32.mrf.mxu0
  %v398 = vadd.f32 0.0, %v397
  %v399 = vpop.f32.mrf.mxu0
  %v400 = vadd.f32 0.0, %v399
  %401 = vmatmul.bf16.gmra.mxu0 %v233
  %v402 = vpop.f32.mrf.mxu0
  %v403 = vadd.f32 0.0, %v402
  %v404 = vpop.f32.mrf.mxu0
  %v405 = vadd.f32 0.0, %v404
  %406 = vmatmul.bf16.gmra.mxu0 %v234
  %v407 = vpop.f32.mrf.mxu0
  %v408 = vadd.f32 0.0, %v407
  %v409 = vpop.f32.mrf.mxu0
  %v410 = vadd.f32 0.0, %v409
  %411 = vmatmul.bf16.gmra.mxu0 %v235
  %v412 = vpop.f32.mrf.mxu0
  %v413 = vadd.f32 0.0, %v412
  %v414 = vpop.f32.mrf.mxu0
  %v415 = vadd.f32 0.0, %v414
  %416 = vmatmul.bf16.gmra.mxu0 %v236
  %v417 = vpop.f32.mrf.mxu0
  %v418 = vadd.f32 0.0, %v417
  %v419 = vpop.f32.mrf.mxu0
  %v420 = vadd.f32 0.0, %v419
  %421 = vmatmul.bf16.gmra.mxu0 %v237
  %v422 = vpop.f32.mrf.mxu0
  %v423 = vadd.f32 0.0, %v422
  %v424 = vpop.f32.mrf.mxu0
  %v425 = vadd.f32 0.0, %v424
  %426 = vmatmul.bf16.gmra.mxu0 %v238
  %v427 = vpop.f32.mrf.mxu0
  %v428 = vadd.f32 0.0, %v427
  %v429 = vpop.f32.mrf.mxu0
  %v430 = vadd.f32 0.0, %v429
  %431 = vmatmul.bf16.gmra.mxu0 %v239
  %v432 = vpop.f32.mrf.mxu0
  %v433 = vadd.f32 0.0, %v432
  %v434 = vpop.f32.mrf.mxu0
  %v435 = vadd.f32 0.0, %v434
  %436 = vmatmul.bf16.gmra.mxu0 %v240
  %v437 = vpop.f32.mrf.mxu0
  %v438 = vadd.f32 0.0, %v437
  %v439 = vpop.f32.mrf.mxu0
  %v440 = vadd.f32 0.0, %v439
  %441 = vmatmul.bf16.gmra.mxu0 %v241
  %v442 = vpop.f32.mrf.mxu0
  %v443 = vadd.f32 0.0, %v442
  %v444 = vpop.f32.mrf.mxu0
  %v445 = vadd.f32 0.0, %v444
  %446 = vmatmul.bf16.gmra.mxu0 %v242
  %v447 = vpop.f32.mrf.mxu0
  %v448 = vadd.f32 0.0, %v447
  %v449 = vpop.f32.mrf.mxu0
  %v450 = vadd.f32 0.0, %v449
  %451 = vmatmul.bf16.gmra.mxu0 %v243
  %v452 = vpop.f32.mrf.mxu0
  %v453 = vadd.f32 0.0, %v452
  %v454 = vpop.f32.mrf.mxu0
  %v455 = vadd.f32 0.0, %v454
  %456 = vmatmul.bf16.gmra.mxu0 %v244
  %v457 = vpop.f32.mrf.mxu0
  %v458 = vadd.f32 0.0, %v457
  %v459 = vpop.f32.mrf.mxu0
  %v460 = vadd.f32 0.0, %v459
  %461 = vmatmul.bf16.gmra.mxu0 %v245
  %v462 = vpop.f32.mrf.mxu0
  %v463 = vadd.f32 0.0, %v462
  %v464 = vpop.f32.mrf.mxu0
  %v465 = vadd.f32 0.0, %v464
  %466 = vmatmul.bf16.gmra.mxu0 %v246
  %v467 = vpop.f32.mrf.mxu0
  %v468 = vadd.f32 0.0, %v467
  %v469 = vpop.f32.mrf.mxu0
  %v470 = vadd.f32 0.0, %v469
  %471 = vmatmul.bf16.gmra.mxu0 %v247
  %v472 = vpop.f32.mrf.mxu0
  %v473 = vadd.f32 0.0, %v472
  %v474 = vpop.f32.mrf.mxu0
  %v475 = vadd.f32 0.0, %v474
  %476 = vmatmul.bf16.gmra.mxu0 %v248
  %v477 = vpop.f32.mrf.mxu0
  %v478 = vadd.f32 0.0, %v477
  %v479 = vpop.f32.mrf.mxu0
  %v480 = vadd.f32 0.0, %v479
  %481 = vmatmul.bf16.gmra.mxu0 %v249
  %v482 = vpop.f32.mrf.mxu0
  %v483 = vadd.f32 0.0, %v482
  %v484 = vpop.f32.mrf.mxu0
  %v485 = vadd.f32 0.0, %v484
  %486 = vmatmul.bf16.gmra.mxu0 %v250
  %v487 = vpop.f32.mrf.mxu0
  %v488 = vadd.f32 0.0, %v487
  %v489 = vpop.f32.mrf.mxu0
  %v490 = vadd.f32 0.0, %v489
  %491 = vmatmul.bf16.gmra.mxu0 %v251
  %v492 = vpop.f32.mrf.mxu0
  %v493 = vadd.f32 0.0, %v492
  %v494 = vpop.f32.mrf.mxu0
  %v495 = vadd.f32 0.0, %v494
  %496 = vmatmul.bf16.gmra.mxu0 %v252
  %v497 = vpop.f32.mrf.mxu0
  %v498 = vadd.f32 0.0, %v497
  %v499 = vpop.f32.mrf.mxu0
  %v500 = vadd.f32 0.0, %v499
  %501 = vdwg.mxu0
  %v502 = vpack.c.bf16 %v343, %v343
  %v503 = vpack.c.bf16 %v345, %v345
  %v504 = vpack.c.bf16 %v348, %v348
  %v505 = vpack.c.bf16 %v350, %v350
  %v506 = vpack.c.bf16 %v353, %v353
  %v507 = vpack.c.bf16 %v355, %v355
  %v508 = vpack.c.bf16 %v358, %v358
  %v509 = vpack.c.bf16 %v360, %v360
  %v510 = vpack.c.bf16 %v363, %v363
  %v511 = vpack.c.bf16 %v365, %v365
  %v512 = vpack.c.bf16 %v368, %v368
  %v513 = vpack.c.bf16 %v370, %v370
  %v514 = vpack.c.bf16 %v373, %v373
  %v515 = vpack.c.bf16 %v375, %v375
  %v516 = vpack.c.bf16 %v378, %v378
  %v517 = vpack.c.bf16 %v380, %v380
  %v518 = vpack.c.bf16 %v383, %v383
  %v519 = vpack.c.bf16 %v385, %v385
  %v520 = vpack.c.bf16 %v388, %v388
  %v521 = vpack.c.bf16 %v390, %v390
  %v522 = vpack.c.bf16 %v393, %v393
  %v523 = vpack.c.bf16 %v395, %v395
  %v524 = vpack.c.bf16 %v398, %v398
  %v525 = vpack.c.bf16 %v400, %v400
  %v526 = vpack.c.bf16 %v403, %v403
  %v527 = vpack.c.bf16 %v405, %v405
  %v528 = vpack.c.bf16 %v408, %v408
  %v529 = vpack.c.bf16 %v410, %v410
  %v530 = vpack.c.bf16 %v413, %v413
  %v531 = vpack.c.bf16 %v415, %v415
  %v532 = vpack.c.bf16 %v418, %v418
  %v533 = vpack.c.bf16 %v420, %v420
  %v534 = vpack.c.bf16 %v423, %v423
  %v535 = vpack.c.bf16 %v425, %v425
  %v536 = vpack.c.bf16 %v428, %v428
  %v537 = vpack.c.bf16 %v430, %v430
  %v538 = vpack.c.bf16 %v433, %v433
  %v539 = vpack.c.bf16 %v435, %v435
  %v540 = vpack.c.bf16 %v438, %v438
  %v541 = vpack.c.bf16 %v440, %v440
  %v542 = vpack.c.bf16 %v443, %v443
  %v543 = vpack.c.bf16 %v445, %v445
  %v544 = vpack.c.bf16 %v448, %v448
  %v545 = vpack.c.bf16 %v450, %v450
  %v546 = vpack.c.bf16 %v453, %v453
  %v547 = vpack.c.bf16 %v455, %v455
  %v548 = vpack.c.bf16 %v458, %v458
  %v549 = vpack.c.bf16 %v460, %v460
  %v550 = vpack.c.bf16 %v463, %v463
  %v551 = vpack.c.bf16 %v465, %v465
  %v552 = vpack.c.bf16 %v468, %v468
  %v553 = vpack.c.bf16 %v470, %v470
  %v554 = vpack.c.bf16 %v473, %v473
  %v555 = vpack.c.bf16 %v475, %v475
  %v556 = vpack.c.bf16 %v478, %v478
  %v557 = vpack.c.bf16 %v480, %v480
  %v558 = vpack.c.bf16 %v483, %v483
  %v559 = vpack.c.bf16 %v485, %v485
  %v560 = vpack.c.bf16 %v488, %v488
  %v561 = vpack.c.bf16 %v490, %v490
  %v562 = vpack.c.bf16 %v493, %v493
  %v563 = vpack.c.bf16 %v495, %v495
  %v564 = vpack.c.bf16 %v498, %v498
  %v565 = vpack.c.bf16 %v500, %v500
  %566 = vst [vmem:[%s2] sm:$0xf] %v502
  %567 = vst [vmem:[%s2 + $0x4] sm:$0xf] %v503
  %568 = vst [vmem:[%s2 + $0x8] sm:$0xf] %v504
  %569 = vst [vmem:[%s2 + $0xc] sm:$0xf] %v505
  %570 = vst [vmem:[%s2 + $0x10] sm:$0xf] %v506
  %571 = vst [vmem:[%s2 + $0x14] sm:$0xf] %v507
  %572 = vst [vmem:[%s2 + $0x18] sm:$0xf] %v508
  %573 = vst [vmem:[%s2 + $0x1c] sm:$0xf] %v509
  %574 = vst [vmem:[%s2 + $0x20] sm:$0xf] %v510
  %575 = vst [vmem:[%s2 + $0x24] sm:$0xf] %v511
  %576 = vst [vmem:[%s2 + $0x28] sm:$0xf] %v512
  %577 = vst [vmem:[%s2 + $0x2c] sm:$0xf] %v513
  %578 = vst [vmem:[%s2 + $0x30] sm:$0xf] %v514
  %579 = vst [vmem:[%s2 + $0x34] sm:$0xf] %v515
  %580 = vst [vmem:[%s2 + $0x38] sm:$0xf] %v516
  %581 = vst [vmem:[%s2 + $0x3c] sm:$0xf] %v517
  %582 = vst [vmem:[%s2 + $0x40] sm:$0xf] %v518
  %583 = vst [vmem:[%s2 + $0x44] sm:$0xf] %v519
  %584 = vst [vmem:[%s2 + $0x48] sm:$0xf] %v520
  %585 = vst [vmem:[%s2 + $0x4c] sm:$0xf] %v521
  %586 = vst [vmem:[%s2 + $0x50] sm:$0xf] %v522
  %587 = vst [vmem:[%s2 + $0x54] sm:$0xf] %v523
  %588 = vst [vmem:[%s2 + $0x58] sm:$0xf] %v524
  %589 = vst [vmem:[%s2 + $0x5c] sm:$0xf] %v525
  %590 = vst [vmem:[%s2 + $0x60] sm:$0xf] %v526
  %591 = vst [vmem:[%s2 + $0x64] sm:$0xf] %v527
  %592 = vst [vmem:[%s2 + $0x68] sm:$0xf] %v528
  %593 = vst [vmem:[%s2 + $0x6c] sm:$0xf] %v529
  %594 = vst [vmem:[%s2 + $0x70] sm:$0xf] %v530
  %595 = vst [vmem:[%s2 + $0x74] sm:$0xf] %v531
  %596 = vst [vmem:[%s2 + $0x78] sm:$0xf] %v532
  %597 = vst [vmem:[%s2 + $0x7c] sm:$0xf] %v533
  %598 = vst [vmem:[%s2 + $0x80] sm:$0xf] %v534
  %599 = vst [vmem:[%s2 + $0x84] sm:$0xf] %v535
  %600 = vst [vmem:[%s2 + $0x88] sm:$0xf] %v536
  %601 = vst [vmem:[%s2 + $0x8c] sm:$0xf] %v537
  %602 = vst [vmem:[%s2 + $0x90] sm:$0xf] %v538
  %603 = vst [vmem:[%s2 + $0x94] sm:$0xf] %v539
  %604 = vst [vmem:[%s2 + $0x98] sm:$0xf] %v540
  %605 = vst [vmem:[%s2 + $0x9c] sm:$0xf] %v541
  %606 = vst [vmem:[%s2 + $0xa0] sm:$0xf] %v542
  %607 = vst [vmem:[%s2 + $0xa4] sm:$0xf] %v543
  %608 = vst [vmem:[%s2 + $0xa8] sm:$0xf] %v544
  %609 = vst [vmem:[%s2 + $0xac] sm:$0xf] %v545
  %610 = vst [vmem:[%s2 + $0xb0] sm:$0xf] %v546
  %611 = vst [vmem:[%s2 + $0xb4] sm:$0xf] %v547
  %612 = vst [vmem:[%s2 + $0xb8] sm:$0xf] %v548
  %613 = vst [vmem:[%s2 + $0xbc] sm:$0xf] %v549
  %614 = vst [vmem:[%s2 + $0xc0] sm:$0xf] %v550
  %615 = vst [vmem:[%s2 + $0xc4] sm:$0xf] %v551
  %616 = vst [vmem:[%s2 + $0xc8] sm:$0xf] %v552
  %617 = vst [vmem:[%s2 + $0xcc] sm:$0xf] %v553
  %618 = vst [vmem:[%s2 + $0xd0] sm:$0xf] %v554
  %619 = vst [vmem:[%s2 + $0xd4] sm:$0xf] %v555
  %620 = vst [vmem:[%s2 + $0xd8] sm:$0xf] %v556
  %621 = vst [vmem:[%s2 + $0xdc] sm:$0xf] %v557
  %622 = vst [vmem:[%s2 + $0xe0] sm:$0xf] %v558
  %623 = vst [vmem:[%s2 + $0xe4] sm:$0xf] %v559
  %624 = vst [vmem:[%s2 + $0xe8] sm:$0xf] %v560
  %625 = vst [vmem:[%s2 + $0xec] sm:$0xf] %v561
  %626 = vst [vmem:[%s2 + $0xf0] sm:$0xf] %v562
  %627 = vst [vmem:[%s2 + $0xf4] sm:$0xf] %v563
  %628 = vst [vmem:[%s2 + $0xf8] sm:$0xf] %v564
  %629 = vst [vmem:[%s2 + $0xfc] sm:$0xf] %v565
  %p630 = scmp.eq.s32.totalorder 0, 0
  // Predicated region
  $region10: #{gen_block_forward.2} parent=0 // pred_check
    %p631 = pneg %p630
  $region11: #{gen_block_forward.2} parent=0 // pred_check_branch
    %633 = sbr.rel (%p631) target = $region13
  $region12: #{gen_block_forward.2} parent=0 // pred_region
    %634 = vst [vmem:[%s3] sm:$0x3] 0.0
  $region13: #{gen_block_forward.2} parent=0 // pred_fallthru
    _
  %v635 = vld [vmem:[%s3] sm:$0x1]
  %v636 = vadd.f32 %v343, %v345
  %v637 = vadd.f32 %v636, %v348
  %v638 = vadd.f32 %v637, %v350
  %v639 = vadd.f32 %v638, %v353
  %v640 = vadd.f32 %v639, %v355
  %v641 = vadd.f32 %v640, %v358
  %v642 = vadd.f32 %v641, %v360
  %v643 = vadd.f32 %v642, %v363
  %v644 = vadd.f32 %v643, %v365
  %v645 = vadd.f32 %v644, %v368
  %v646 = vadd.f32 %v645, %v370
  %v647 = vadd.f32 %v646, %v373
  %v648 = vadd.f32 %v647, %v375
  %v649 = vadd.f32 %v648, %v378
  %v650 = vadd.f32 %v649, %v380
  %v651 = vadd.f32 %v650, %v383
  %v652 = vadd.f32 %v651, %v385
  %v653 = vadd.f32 %v652, %v388
  %v654 = vadd.f32 %v653, %v390
  %v655 = vadd.f32 %v654, %v393
  %v656 = vadd.f32 %v655, %v395
  %v657 = vadd.f32 %v656, %v398
  %v658 = vadd.f32 %v657, %v400
  %v659 = vadd.f32 %v658, %v403
  %v660 = vadd.f32 %v659, %v405
  %v661 = vadd.f32 %v660, %v408
  %v662 = vadd.f32 %v661, %v410
  %v663 = vadd.f32 %v662, %v413
  %v664 = vadd.f32 %v663, %v415
  %v665 = vadd.f32 %v664, %v418
  %v666 = vadd.f32 %v665, %v420
  %v667 = vadd.f32 %v666, %v423
  %v668 = vadd.f32 %v667, %v425
  %v669 = vadd.f32 %v668, %v428
  %v670 = vadd.f32 %v669, %v430
  %v671 = vadd.f32 %v670, %v433
  %v672 = vadd.f32 %v671, %v435
  %v673 = vadd.f32 %v672, %v438
  %v674 = vadd.f32 %v673, %v440
  %v675 = vadd.f32 %v674, %v443
  %v676 = vadd.f32 %v675, %v445
  %v677 = vadd.f32 %v676, %v448
  %v678 = vadd.f32 %v677, %v450
  %v679 = vadd.f32 %v678, %v453
  %v680 = vadd.f32 %v679, %v455
  %v681 = vadd.f32 %v680, %v458
  %v682 = vadd.f32 %v681, %v460
  %v683 = vadd.f32 %v682, %v463
  %v684 = vadd.f32 %v683, %v465
  %v685 = vadd.f32 %v684, %v468
  %v686 = vadd.f32 %v685, %v470
  %v687 = vadd.f32 %v686, %v473
  %v688 = vadd.f32 %v687, %v475
  %v689 = vadd.f32 %v688, %v478
  %v690 = vadd.f32 %v689, %v480
  %v691 = vadd.f32 %v690, %v483
  %v692 = vadd.f32 %v691, %v485
  %v693 = vadd.f32 %v692, %v488
  %v694 = vadd.f32 %v693, %v490
  %v695 = vadd.f32 %v694, %v493
  %v696 = vadd.f32 %v695, %v495
  %v697 = vadd.f32 %v696, %v498
  %v698 = vadd.f32 %v697, %v500
  %v699 = vrot.slane %v698, 4
  %v700 = vadd.f32 %v698, %v699
  %v701 = vrot.slane %v700, 2
  %v702 = vadd.f32 %v700, %v701
  %v703 = vrot.slane %v702, 1
  %v704 = vadd.f32 %v702, %v703
  %v705 = vadd.f32 %v635, %v704
  %706 = vst [vmem:[%s3] sm:$0x1] %v705
  %v707 = vld [vmem:[%s3 + $0x1] sm:$0x1]
  %v708 = vmul.f32 %v343, %v343
  %v709 = vmul.f32 %v345, %v345
  %v710 = vmul.f32 %v348, %v348
  %v711 = vmul.f32 %v350, %v350
  %v712 = vmul.f32 %v353, %v353
  %v713 = vmul.f32 %v355, %v355
  %v714 = vmul.f32 %v358, %v358
  %v715 = vmul.f32 %v360, %v360
  %v716 = vmul.f32 %v363, %v363
  %v717 = vmul.f32 %v365, %v365
  %v718 = vmul.f32 %v368, %v368
  %v719 = vmul.f32 %v370, %v370
  %v720 = vmul.f32 %v373, %v373
  %v721 = vmul.f32 %v375, %v375
  %v722 = vmul.f32 %v378, %v378
  %v723 = vmul.f32 %v380, %v380
  %v724 = vmul.f32 %v383, %v383
  %v725 = vmul.f32 %v385, %v385
  %v726 = vmul.f32 %v388, %v388
  %v727 = vmul.f32 %v390, %v390
  %v728 = vmul.f32 %v393, %v393
  %v729 = vmul.f32 %v395, %v395
  %v730 = vmul.f32 %v398, %v398
  %v731 = vmul.f32 %v400, %v400
  %v732 = vmul.f32 %v403, %v403
  %v733 = vmul.f32 %v405, %v405
  %v734 = vmul.f32 %v408, %v408
  %v735 = vmul.f32 %v410, %v410
  %v736 = vmul.f32 %v413, %v413
  %v737 = vmul.f32 %v415, %v415
  %v738 = vmul.f32 %v418, %v418
  %v739 = vmul.f32 %v420, %v420
  %v740 = vmul.f32 %v423, %v423
  %v741 = vmul.f32 %v425, %v425
  %v742 = vmul.f32 %v428, %v428
  %v743 = vmul.f32 %v430, %v430
  %v744 = vmul.f32 %v433, %v433
  %v745 = vmul.f32 %v435, %v435
  %v746 = vmul.f32 %v438, %v438
  %v747 = vmul.f32 %v440, %v440
  %v748 = vmul.f32 %v443, %v443
  %v749 = vmul.f32 %v445, %v445
  %v750 = vmul.f32 %v448, %v448
  %v751 = vmul.f32 %v450, %v450
  %v752 = vmul.f32 %v453, %v453
  %v753 = vmul.f32 %v455, %v455
  %v754 = vmul.f32 %v458, %v458
  %v755 = vmul.f32 %v460, %v460
  %v756 = vmul.f32 %v463, %v463
  %v757 = vmul.f32 %v465, %v465
  %v758 = vmul.f32 %v468, %v468
  %v759 = vmul.f32 %v470, %v470
  %v760 = vmul.f32 %v473, %v473
  %v761 = vmul.f32 %v475, %v475
  %v762 = vmul.f32 %v478, %v478
  %v763 = vmul.f32 %v480, %v480
  %v764 = vmul.f32 %v483, %v483
  %v765 = vmul.f32 %v485, %v485
  %v766 = vmul.f32 %v488, %v488
  %v767 = vmul.f32 %v490, %v490
  %v768 = vmul.f32 %v493, %v493
  %v769 = vmul.f32 %v495, %v495
  %v770 = vmul.f32 %v498, %v498
  %v771 = vmul.f32 %v500, %v500
  %v772 = vadd.f32 %v708, %v709
  %v773 = vadd.f32 %v772, %v710
  %v774 = vadd.f32 %v773, %v711
  %v775 = vadd.f32 %v774, %v712
  %v776 = vadd.f32 %v775, %v713
  %v777 = vadd.f32 %v776, %v714
  %v778 = vadd.f32 %v777, %v715
  %v779 = vadd.f32 %v778, %v716
  %v780 = vadd.f32 %v779, %v717
  %v781 = vadd.f32 %v780, %v718
  %v782 = vadd.f32 %v781, %v719
  %v783 = vadd.f32 %v782, %v720
  %v784 = vadd.f32 %v783, %v721
  %v785 = vadd.f32 %v784, %v722
  %v786 = vadd.f32 %v785, %v723
  %v787 = vadd.f32 %v786, %v724
  %v788 = vadd.f32 %v787, %v725
  %v789 = vadd.f32 %v788, %v726
  %v790 = vadd.f32 %v789, %v727
  %v791 = vadd.f32 %v790, %v728
  %v792 = vadd.f32 %v791, %v729
  %v793 = vadd.f32 %v792, %v730
  %v794 = vadd.f32 %v793, %v731
  %v795 = vadd.f32 %v794, %v732
  %v796 = vadd.f32 %v795, %v733
  %v797 = vadd.f32 %v796, %v734
  %v798 = vadd.f32 %v797, %v735
  %v799 = vadd.f32 %v798, %v736
  %v800 = vadd.f32 %v799, %v737
  %v801 = vadd.f32 %v800, %v738
  %v802 = vadd.f32 %v801, %v739
  %v803 = vadd.f32 %v802, %v740
  %v804 = vadd.f32 %v803, %v741
  %v805 = vadd.f32 %v804, %v742
  %v806 = vadd.f32 %v805, %v743
  %v807 = vadd.f32 %v806, %v744
  %v808 = vadd.f32 %v807, %v745
  %v809 = vadd.f32 %v808, %v746
  %v810 = vadd.f32 %v809, %v747
  %v811 = vadd.f32 %v810, %v748
  %v812 = vadd.f32 %v811, %v749
  %v813 = vadd.f32 %v812, %v750
  %v814 = vadd.f32 %v813, %v751
  %v815 = vadd.f32 %v814, %v752
  %v816 = vadd.f32 %v815, %v753
  %v817 = vadd.f32 %v816, %v754
  %v818 = vadd.f32 %v817, %v755
  %v819 = vadd.f32 %v818, %v756
  %v820 = vadd.f32 %v819, %v757
  %v821 = vadd.f32 %v820, %v758
  %v822 = vadd.f32 %v821, %v759
  %v823 = vadd.f32 %v822, %v760
  %v824 = vadd.f32 %v823, %v761
  %v825 = vadd.f32 %v824, %v762
  %v826 = vadd.f32 %v825, %v763
  %v827 = vadd.f32 %v826, %v764
  %v828 = vadd.f32 %v827, %v765
  %v829 = vadd.f32 %v828, %v766
  %v830 = vadd.f32 %v829, %v767
  %v831 = vadd.f32 %v830, %v768
  %v832 = vadd.f32 %v831, %v769
  %v833 = vadd.f32 %v832, %v770
  %v834 = vadd.f32 %v833, %v771
  %v835 = vrot.slane %v834, 4
  %v836 = vadd.f32 %v834, %v835
  %v837 = vrot.slane %v836, 2
  %v838 = vadd.f32 %v836, %v837
  %v839 = vrot.slane %v838, 1
  %v840 = vadd.f32 %v838, %v839
  %v841 = vadd.f32 %v707, %v840
  %842 = vst [vmem:[%s3 + $0x1] sm:$0x1] %v841
  // Predicated region
  $region14: #{gen_block_forward.2} parent=0 // pred_check
    _
  $region15: #{gen_block_forward.2} parent=0 // pred_check_branch
    %844 = sbr.rel (0) target = $region17
  $region16: #{gen_block_forward.2} parent=0 // pred_region
    _
  $region17: #{gen_block_forward.2} parent=0 // pred_fallthru
    _
  // Predicated region
  $region18: #{gen_block_forward.2} parent=0 // pred_check
    _
  $region19: #{gen_block_forward.2} parent=0 // pred_check_branch
    %846 = sbr.rel (0) target = $region21
  $region20: #{gen_block_forward.2} parent=0 // pred_region
    _
  $region21: #{gen_block_forward.2} parent=0 // pred_fallthru
    _
  // Predicated region
  $region22: #{gen_block_forward.2} parent=0 // pred_check
    _
  $region23: #{gen_block_forward.2} parent=0 // pred_check_branch
    %848 = sbr.rel (0) target = $region25
  $region24: #{gen_block_forward.2} parent=0 // pred_region
    _
  $region25: #{gen_block_forward.2} parent=0 // pred_fallthru
    _
  // Predicated region
  $region26: #{gen_block_forward.2} parent=0 // pred_check
    _
  $region27: #{gen_block_forward.2} parent=0 // pred_check_branch
    %850 = sbr.rel (0) target = $region29
  $region28: #{gen_block_forward.2} parent=0 // pred_region
    _
  $region29: #{gen_block_forward.2} parent=0 // pred_fallthru
    _

// kernel: gen_block_forward.3
$region0: #{gen_block_forward.3}
  #allocation0 [shape = 'u32[]', space=smem, size = 0x4, offset = 0x4, fixed_abs, tag = 'smem constant byte address 0x4 - core index']
  #allocation1 [shape = 'u32[72,128]{1,0:T(1,128)}', space=vmem, size = 0x9000, scoped, tag = 'internal scratch']
  %s0 = inlined_call_operand.vmem [shape: bf16[512,128], index: 0, kind: input, shape index: {}]
  %s1 = inlined_call_operand.vmem [shape: f32[1,128], index: 1, kind: input, shape index: {}]
  %s2 = inlined_call_operand.vmem [shape: f32[1,128], index: 2, kind: input, shape index: {}]
  %s3 = inlined_call_operand.vmem [shape: f32[512,128], index: 3, kind: output, shape index: {}]
  %s4 = sld [smem:[#allocation0]]
  $region22: #{gen_block_forward.3} parent=0
    _
  %s6 = ssub.s32 1, %s4
  %s7 = scalar_select 0, %s6, %s4
  // Predicated region
  $region2: #{gen_block_forward.3} parent=0 // pred_check
    _
  $region3: #{gen_block_forward.3} parent=0 // pred_check_branch
    %9 = sbr.rel (0) target = $region5
  $region4: #{gen_block_forward.3} parent=0 // pred_region
    _
  $region5: #{gen_block_forward.3} parent=0 // pred_fallthru
    _
  // Predicated region
  $region6: #{gen_block_forward.3} parent=0 // pred_check
    _
  $region7: #{gen_block_forward.3} parent=0 // pred_check_branch
    %11 = sbr.rel (0) target = $region9
  $region8: #{gen_block_forward.3} parent=0 // pred_region
    _
  $region9: #{gen_block_forward.3} parent=0 // pred_fallthru
    _
  // Predicated region
  $region10: #{gen_block_forward.3} parent=0 // pred_check
    _
  $region11: #{gen_block_forward.3} parent=0 // pred_check_branch
    %13 = sbr.rel (0) target = $region13
  $region12: #{gen_block_forward.3} parent=0 // pred_region
    _
  $region13: #{gen_block_forward.3} parent=0 // pred_fallthru
    _
  %v14 = vld [vmem:[%s0] sm:$0xf]
  %v15 = vld [vmem:[%s0 + $0x4] sm:$0xf]
  %v16 = vld [vmem:[%s0 + $0x8] sm:$0xf]
  %v17 = vld [vmem:[%s0 + $0xc] sm:$0xf]
  %v18 = vld [vmem:[%s0 + $0x10] sm:$0xf]
  %v19 = vld [vmem:[%s0 + $0x14] sm:$0xf]
  %v20 = vld [vmem:[%s0 + $0x18] sm:$0xf]
  %v21 = vld [vmem:[%s0 + $0x1c] sm:$0xf]
  %v22 = vld [vmem:[%s0 + $0x20] sm:$0xf]
  %v23 = vld [vmem:[%s0 + $0x24] sm:$0xf]
  %v24 = vld [vmem:[%s0 + $0x28] sm:$0xf]
  %v25 = vld [vmem:[%s0 + $0x2c] sm:$0xf]
  %v26 = vld [vmem:[%s0 + $0x30] sm:$0xf]
  %v27 = vld [vmem:[%s0 + $0x34] sm:$0xf]
  %v28 = vld [vmem:[%s0 + $0x38] sm:$0xf]
  %v29 = vld [vmem:[%s0 + $0x3c] sm:$0xf]
  %v30 = vld [vmem:[%s0 + $0x40] sm:$0xf]
  %v31 = vld [vmem:[%s0 + $0x44] sm:$0xf]
  %v32 = vld [vmem:[%s0 + $0x48] sm:$0xf]
  %v33 = vld [vmem:[%s0 + $0x4c] sm:$0xf]
  %v34 = vld [vmem:[%s0 + $0x50] sm:$0xf]
  %v35 = vld [vmem:[%s0 + $0x54] sm:$0xf]
  %v36 = vld [vmem:[%s0 + $0x58] sm:$0xf]
  %v37 = vld [vmem:[%s0 + $0x5c] sm:$0xf]
  %v38 = vld [vmem:[%s0 + $0x60] sm:$0xf]
  %v39 = vld [vmem:[%s0 + $0x64] sm:$0xf]
  %v40 = vld [vmem:[%s0 + $0x68] sm:$0xf]
  %v41 = vld [vmem:[%s0 + $0x6c] sm:$0xf]
  %v42 = vld [vmem:[%s0 + $0x70] sm:$0xf]
  %v43 = vld [vmem:[%s0 + $0x74] sm:$0xf]
  %v44 = vld [vmem:[%s0 + $0x78] sm:$0xf]
  %v45 = vld [vmem:[%s0 + $0x7c] sm:$0xf]
  %v46 = vld [vmem:[%s0 + $0x80] sm:$0xf]
  %v47 = vld [vmem:[%s0 + $0x84] sm:$0xf]
  %v48 = vld [vmem:[%s0 + $0x88] sm:$0xf]
  %v49 = vld [vmem:[%s0 + $0x8c] sm:$0xf]
  %v50 = vld [vmem:[%s0 + $0x90] sm:$0xf]
  %v51 = vld [vmem:[%s0 + $0x94] sm:$0xf]
  %v52 = vld [vmem:[%s0 + $0x98] sm:$0xf]
  %v53 = vld [vmem:[%s0 + $0x9c] sm:$0xf]
  %v54 = vld [vmem:[%s0 + $0xa0] sm:$0xf]
  %v55 = vld [vmem:[%s0 + $0xa4] sm:$0xf]
  %v56 = vld [vmem:[%s0 + $0xa8] sm:$0xf]
  %v57 = vld [vmem:[%s0 + $0xac] sm:$0xf]
  %v58 = vld [vmem:[%s0 + $0xb0] sm:$0xf]
  %v59 = vld [vmem:[%s0 + $0xb4] sm:$0xf]
  %v60 = vld [vmem:[%s0 + $0xb8] sm:$0xf]
  %v61 = vld [vmem:[%s0 + $0xbc] sm:$0xf]
  %v62 = vld [vmem:[%s0 + $0xc0] sm:$0xf]
  %v63 = vld [vmem:[%s0 + $0xc4] sm:$0xf]
  %v64 = vld [vmem:[%s0 + $0xc8] sm:$0xf]
  %v65 = vld [vmem:[%s0 + $0xcc] sm:$0xf]
  %v66 = vld [vmem:[%s0 + $0xd0] sm:$0xf]
  %v67 = vld [vmem:[%s0 + $0xd4] sm:$0xf]
  %v68 = vld [vmem:[%s0 + $0xd8] sm:$0xf]
  %v69 = vld [vmem:[%s0 + $0xdc] sm:$0xf]
  %v70 = vld [vmem:[%s0 + $0xe0] sm:$0xf]
  %v71 = vld [vmem:[%s0 + $0xe4] sm:$0xf]
  %v72 = vld [vmem:[%s0 + $0xe8] sm:$0xf]
  %v73 = vld [vmem:[%s0 + $0xec] sm:$0xf]
  %v74 = vld [vmem:[%s0 + $0xf0] sm:$0xf]
  %v75 = vld [vmem:[%s0 + $0xf4] sm:$0xf]
  %v76 = vld [vmem:[%s0 + $0xf8] sm:$0xf]
  %v77 = vld [vmem:[%s0 + $0xfc] sm:$0xf]
  %v78 = vunpack.c.l.bf16 %v14
  %v79 = vunpack.c.l.bf16 %v15
  %v80 = vunpack.c.l.bf16 %v16
  %v81 = vunpack.c.l.bf16 %v17
  %v82 = vunpack.c.l.bf16 %v18
  %v83 = vunpack.c.l.bf16 %v19
  %v84 = vunpack.c.l.bf16 %v20
  %v85 = vunpack.c.l.bf16 %v21
  %v86 = vunpack.c.l.bf16 %v22
  %v87 = vunpack.c.l.bf16 %v23
  %v88 = vunpack.c.l.bf16 %v24
  %v89 = vunpack.c.l.bf16 %v25
  %v90 = vunpack.c.l.bf16 %v26
  %v91 = vunpack.c.l.bf16 %v27
  %v92 = vunpack.c.l.bf16 %v28
  %v93 = vunpack.c.l.bf16 %v29
  %v94 = vunpack.c.l.bf16 %v30
  %v95 = vunpack.c.l.bf16 %v31
  %v96 = vunpack.c.l.bf16 %v32
  %v97 = vunpack.c.l.bf16 %v33
  %v98 = vunpack.c.l.bf16 %v34
  %v99 = vunpack.c.l.bf16 %v35
  %v100 = vunpack.c.l.bf16 %v36
  %v101 = vunpack.c.l.bf16 %v37
  %v102 = vunpack.c.l.bf16 %v38
  %v103 = vunpack.c.l.bf16 %v39
  %v104 = vunpack.c.l.bf16 %v40
  %v105 = vunpack.c.l.bf16 %v41
  %v106 = vunpack.c.l.bf16 %v42
  %v107 = vunpack.c.l.bf16 %v43
  %v108 = vunpack.c.l.bf16 %v44
  %v109 = vunpack.c.l.bf16 %v45
  %v110 = vunpack.c.l.bf16 %v46
  %v111 = vunpack.c.l.bf16 %v47
  %v112 = vunpack.c.l.bf16 %v48
  %v113 = vunpack.c.l.bf16 %v49
  %v114 = vunpack.c.l.bf16 %v50
  %v115 = vunpack.c.l.bf16 %v51
  %v116 = vunpack.c.l.bf16 %v52
  %v117 = vunpack.c.l.bf16 %v53
  %v118 = vunpack.c.l.bf16 %v54
  %v119 = vunpack.c.l.bf16 %v55
  %v120 = vunpack.c.l.bf16 %v56
  %v121 = vunpack.c.l.bf16 %v57
  %v122 = vunpack.c.l.bf16 %v58
  %v123 = vunpack.c.l.bf16 %v59
  %v124 = vunpack.c.l.bf16 %v60
  %v125 = vunpack.c.l.bf16 %v61
  %v126 = vunpack.c.l.bf16 %v62
  %v127 = vunpack.c.l.bf16 %v63
  %v128 = vunpack.c.l.bf16 %v64
  %v129 = vunpack.c.l.bf16 %v65
  %v130 = vunpack.c.l.bf16 %v66
  %v131 = vunpack.c.l.bf16 %v67
  %v132 = vunpack.c.l.bf16 %v68
  %v133 = vunpack.c.l.bf16 %v69
  %v134 = vunpack.c.l.bf16 %v70
  %v135 = vunpack.c.l.bf16 %v71
  %v136 = vunpack.c.l.bf16 %v72
  %v137 = vunpack.c.l.bf16 %v73
  %v138 = vunpack.c.l.bf16 %v74
  %v139 = vunpack.c.l.bf16 %v75
  %v140 = vunpack.c.l.bf16 %v76
  %v141 = vunpack.c.l.bf16 %v77
  %v142 = vld [vmem:[%s1] sm:$0x1]
  %v144 = vperm.slane %v142, 0
  %v146 = vmul.f32 %v78, %v144
  %v147 = vmul.f32 %v79, %v144
  %v148 = vmul.f32 %v80, %v144
  %v149 = vmul.f32 %v81, %v144
  %v150 = vmul.f32 %v82, %v144
  %v151 = vmul.f32 %v83, %v144
  %v152 = vmul.f32 %v84, %v144
  %v153 = vmul.f32 %v85, %v144
  %v154 = vmul.f32 %v86, %v144
  %v155 = vmul.f32 %v87, %v144
  %v156 = vmul.f32 %v88, %v144
  %v157 = vmul.f32 %v89, %v144
  %v158 = vmul.f32 %v90, %v144
  %v159 = vmul.f32 %v91, %v144
  %v160 = vmul.f32 %v92, %v144
  %v161 = vmul.f32 %v93, %v144
  %v162 = vmul.f32 %v94, %v144
  %v163 = vmul.f32 %v95, %v144
  %v164 = vmul.f32 %v96, %v144
  %v165 = vmul.f32 %v97, %v144
  %v166 = vmul.f32 %v98, %v144
  %v167 = vmul.f32 %v99, %v144
  %v168 = vmul.f32 %v100, %v144
  %v169 = vmul.f32 %v101, %v144
  %v170 = vmul.f32 %v102, %v144
  %v171 = vmul.f32 %v103, %v144
  %v172 = vmul.f32 %v104, %v144
  %v173 = vmul.f32 %v105, %v144
  %v174 = vmul.f32 %v106, %v144
  %v175 = vmul.f32 %v107, %v144
  %v176 = vmul.f32 %v108, %v144
  %v177 = vmul.f32 %v109, %v144
  %v178 = vmul.f32 %v110, %v144
  %v179 = vmul.f32 %v111, %v144
  %v180 = vmul.f32 %v112, %v144
  %v181 = vmul.f32 %v113, %v144
  %v182 = vmul.f32 %v114, %v144
  %v183 = vmul.f32 %v115, %v144
  %v184 = vmul.f32 %v116, %v144
  %v185 = vmul.f32 %v117, %v144
  %v186 = vmul.f32 %v118, %v144
  %v187 = vmul.f32 %v119, %v144
  %v188 = vmul.f32 %v120, %v144
  %v189 = vmul.f32 %v121, %v144
  %v190 = vmul.f32 %v122, %v144
  %v191 = vmul.f32 %v123, %v144
  %v192 = vmul.f32 %v124, %v144
  %v193 = vmul.f32 %v125, %v144
  %v194 = vmul.f32 %v126, %v144
  %v195 = vmul.f32 %v127, %v144
  %v196 = vmul.f32 %v128, %v144
  %v197 = vmul.f32 %v129, %v144
  %v198 = vmul.f32 %v130, %v144
  %v199 = vmul.f32 %v131, %v144
  %v200 = vmul.f32 %v132, %v144
  %v201 = vmul.f32 %v133, %v144
  %v202 = vmul.f32 %v134, %v144
  %v203 = vmul.f32 %v135, %v144
  %v204 = vmul.f32 %v136, %v144
  %v205 = vmul.f32 %v137, %v144
  %v206 = vmul.f32 %v138, %v144
  %v207 = vmul.f32 %v139, %v144
  %v208 = vmul.f32 %v140, %v144
  %v209 = vmul.f32 %v141, %v144
  %v210 = vld [vmem:[%s2] sm:$0x1]
  %v212 = vperm.slane %v210, 0
  %v214 = vadd.f32 %v146, %v212
  %v215 = vadd.f32 %v147, %v212
  %v216 = vadd.f32 %v148, %v212
  %v217 = vadd.f32 %v149, %v212
  %v218 = vadd.f32 %v150, %v212
  %v219 = vadd.f32 %v151, %v212
  %v220 = vadd.f32 %v152, %v212
  %v221 = vadd.f32 %v153, %v212
  %v222 = vadd.f32 %v154, %v212
  %v223 = vadd.f32 %v155, %v212
  %v224 = vadd.f32 %v156, %v212
  %v225 = vadd.f32 %v157, %v212
  %v226 = vadd.f32 %v158, %v212
  %v227 = vadd.f32 %v159, %v212
  %v228 = vadd.f32 %v160, %v212
  %v229 = vadd.f32 %v161, %v212
  %v230 = vadd.f32 %v162, %v212
  %v231 = vadd.f32 %v163, %v212
  %v232 = vadd.f32 %v164, %v212
  %v233 = vadd.f32 %v165, %v212
  %v234 = vadd.f32 %v166, %v212
  %v235 = vadd.f32 %v167, %v212
  %v236 = vadd.f32 %v168, %v212
  %v237 = vadd.f32 %v169, %v212
  %v238 = vadd.f32 %v170, %v212
  %v239 = vadd.f32 %v171, %v212
  %v240 = vadd.f32 %v172, %v212
  %v241 = vadd.f32 %v173, %v212
  %v242 = vadd.f32 %v174, %v212
  %v243 = vadd.f32 %v175, %v212
  %v244 = vadd.f32 %v176, %v212
  %v245 = vadd.f32 %v177, %v212
  %v246 = vadd.f32 %v178, %v212
  %v247 = vadd.f32 %v179, %v212
  %v248 = vadd.f32 %v180, %v212
  %v249 = vadd.f32 %v181, %v212
  %v250 = vadd.f32 %v182, %v212
  %v251 = vadd.f32 %v183, %v212
  %v252 = vadd.f32 %v184, %v212
  %v253 = vadd.f32 %v185, %v212
  %v254 = vadd.f32 %v186, %v212
  %v255 = vadd.f32 %v187, %v212
  %v256 = vadd.f32 %v188, %v212
  %v257 = vadd.f32 %v189, %v212
  %v258 = vadd.f32 %v190, %v212
  %v259 = vadd.f32 %v191, %v212
  %v260 = vadd.f32 %v192, %v212
  %v261 = vadd.f32 %v193, %v212
  %v262 = vadd.f32 %v194, %v212
  %v263 = vadd.f32 %v195, %v212
  %v264 = vadd.f32 %v196, %v212
  %v265 = vadd.f32 %v197, %v212
  %v266 = vadd.f32 %v198, %v212
  %v267 = vadd.f32 %v199, %v212
  %v268 = vadd.f32 %v200, %v212
  %v269 = vadd.f32 %v201, %v212
  %v270 = vadd.f32 %v202, %v212
  %v271 = vadd.f32 %v203, %v212
  %v272 = vadd.f32 %v204, %v212
  %v273 = vadd.f32 %v205, %v212
  %v274 = vadd.f32 %v206, %v212
  %v275 = vadd.f32 %v207, %v212
  %v276 = vadd.f32 %v208, %v212
  %v277 = vadd.f32 %v209, %v212
  %v278 = vmax.f32 %v214, 0.0
  %v279 = vmax.f32 %v215, 0.0
  %v280 = vmax.f32 %v216, 0.0
  %v281 = vmax.f32 %v217, 0.0
  %v282 = vmax.f32 %v218, 0.0
  %v283 = vmax.f32 %v219, 0.0
  %v284 = vmax.f32 %v220, 0.0
  %v285 = vmax.f32 %v221, 0.0
  %v286 = vmax.f32 %v222, 0.0
  %v287 = vmax.f32 %v223, 0.0
  %v288 = vmax.f32 %v224, 0.0
  %v289 = vmax.f32 %v225, 0.0
  %v290 = vmax.f32 %v226, 0.0
  %v291 = vmax.f32 %v227, 0.0
  %v292 = vmax.f32 %v228, 0.0
  %v293 = vmax.f32 %v229, 0.0
  %v294 = vmax.f32 %v230, 0.0
  %v295 = vmax.f32 %v231, 0.0
  %v296 = vmax.f32 %v232, 0.0
  %v297 = vmax.f32 %v233, 0.0
  %v298 = vmax.f32 %v234, 0.0
  %v299 = vmax.f32 %v235, 0.0
  %v300 = vmax.f32 %v236, 0.0
  %v301 = vmax.f32 %v237, 0.0
  %v302 = vmax.f32 %v238, 0.0
  %v303 = vmax.f32 %v239, 0.0
  %v304 = vmax.f32 %v240, 0.0
  %v305 = vmax.f32 %v241, 0.0
  %v306 = vmax.f32 %v242, 0.0
  %v307 = vmax.f32 %v243, 0.0
  %v308 = vmax.f32 %v244, 0.0
  %v309 = vmax.f32 %v245, 0.0
  %v310 = vmax.f32 %v246, 0.0
  %v311 = vmax.f32 %v247, 0.0
  %v312 = vmax.f32 %v248, 0.0
  %v313 = vmax.f32 %v249, 0.0
  %v314 = vmax.f32 %v250, 0.0
  %v315 = vmax.f32 %v251, 0.0
  %v316 = vmax.f32 %v252, 0.0
  %v317 = vmax.f32 %v253, 0.0
  %v318 = vmax.f32 %v254, 0.0
  %v319 = vmax.f32 %v255, 0.0
  %v320 = vmax.f32 %v256, 0.0
  %v321 = vmax.f32 %v257, 0.0
  %v322 = vmax.f32 %v258, 0.0
  %v323 = vmax.f32 %v259, 0.0
  %v324 = vmax.f32 %v260, 0.0
  %v325 = vmax.f32 %v261, 0.0
  %v326 = vmax.f32 %v262, 0.0
  %v327 = vmax.f32 %v263, 0.0
  %v328 = vmax.f32 %v264, 0.0
  %v329 = vmax.f32 %v265, 0.0
  %v330 = vmax.f32 %v266, 0.0
  %v331 = vmax.f32 %v267, 0.0
  %v332 = vmax.f32 %v268, 0.0
  %v333 = vmax.f32 %v269, 0.0
  %v334 = vmax.f32 %v270, 0.0
  %v335 = vmax.f32 %v271, 0.0
  %v336 = vmax.f32 %v272, 0.0
  %v337 = vmax.f32 %v273, 0.0
  %v338 = vmax.f32 %v274, 0.0
  %v339 = vmax.f32 %v275, 0.0
  %v340 = vmax.f32 %v276, 0.0
  %v341 = vmax.f32 %v277, 0.0
  %342 = vst [vmem:[%s3] sm:$0xff] %v278
  %343 = vst [vmem:[%s3 + $0x8] sm:$0xff] %v279
  %344 = vst [vmem:[%s3 + $0x10] sm:$0xff] %v280
  %345 = vst [vmem:[%s3 + $0x18] sm:$0xff] %v281
  %346 = vst [vmem:[%s3 + $0x20] sm:$0xff] %v282
  %347 = vst [vmem:[%s3 + $0x28] sm:$0xff] %v283
  %348 = vst [vmem:[%s3 + $0x30] sm:$0xff] %v284
  %349 = vst [vmem:[%s3 + $0x38] sm:$0xff] %v285
  %350 = vst [vmem:[%s3 + $0x40] sm:$0xff] %v286
  %351 = vst [vmem:[%s3 + $0x48] sm:$0xff] %v287
  %352 = vst [vmem:[%s3 + $0x50] sm:$0xff] %v288
  %353 = vst [vmem:[%s3 + $0x58] sm:$0xff] %v289
  %354 = vst [vmem:[%s3 + $0x60] sm:$0xff] %v290
  %355 = vst [vmem:[%s3 + $0x68] sm:$0xff] %v291
  %356 = vst [vmem:[%s3 + $0x70] sm:$0xff] %v292
  %357 = vst [vmem:[%s3 + $0x78] sm:$0xff] %v293
  %358 = vst [vmem:[%s3 + $0x80] sm:$0xff] %v294
  %359 = vst [vmem:[%s3 + $0x88] sm:$0xff] %v295
  %360 = vst [vmem:[%s3 + $0x90] sm:$0xff] %v296
  %361 = vst [vmem:[%s3 + $0x98] sm:$0xff] %v297
  %362 = vst [vmem:[%s3 + $0xa0] sm:$0xff] %v298
  %363 = vst [vmem:[%s3 + $0xa8] sm:$0xff] %v299
  %364 = vst [vmem:[%s3 + $0xb0] sm:$0xff] %v300
  %365 = vst [vmem:[%s3 + $0xb8] sm:$0xff] %v301
  %366 = vst [vmem:[%s3 + $0xc0] sm:$0xff] %v302
  %367 = vst [vmem:[%s3 + $0xc8] sm:$0xff] %v303
  %368 = vst [vmem:[%s3 + $0xd0] sm:$0xff] %v304
  %369 = vst [vmem:[%s3 + $0xd8] sm:$0xff] %v305
  %370 = vst [vmem:[%s3 + $0xe0] sm:$0xff] %v306
  %371 = vst [vmem:[%s3 + $0xe8] sm:$0xff] %v307
  %372 = vst [vmem:[%s3 + $0xf0] sm:$0xff] %v308
  %373 = vst [vmem:[%s3 + $0xf8] sm:$0xff] %v309
  %374 = vst [vmem:[%s3 + $0x100] sm:$0xff] %v310
  %375 = vst [vmem:[%s3 + $0x108] sm:$0xff] %v311
  %376 = vst [vmem:[%s3 + $0x110] sm:$0xff] %v312
  %377 = vst [vmem:[%s3 + $0x118] sm:$0xff] %v313
  %378 = vst [vmem:[%s3 + $0x120] sm:$0xff] %v314
  %379 = vst [vmem:[%s3 + $0x128] sm:$0xff] %v315
  %380 = vst [vmem:[%s3 + $0x130] sm:$0xff] %v316
  %381 = vst [vmem:[%s3 + $0x138] sm:$0xff] %v317
  %382 = vst [vmem:[%s3 + $0x140] sm:$0xff] %v318
  %383 = vst [vmem:[%s3 + $0x148] sm:$0xff] %v319
  %384 = vst [vmem:[%s3 + $0x150] sm:$0xff] %v320
  %385 = vst [vmem:[%s3 + $0x158] sm:$0xff] %v321
  %386 = vst [vmem:[%s3 + $0x160] sm:$0xff] %v322
  %387 = vst [vmem:[%s3 + $0x168] sm:$0xff] %v323
  %388 = vst [vmem:[%s3 + $0x170] sm:$0xff] %v324
  %389 = vst [vmem:[%s3 + $0x178] sm:$0xff] %v325
  %390 = vst [vmem:[%s3 + $0x180] sm:$0xff] %v326
  %391 = vst [vmem:[%s3 + $0x188] sm:$0xff] %v327
  %392 = vst [vmem:[%s3 + $0x190] sm:$0xff] %v328
  %393 = vst [vmem:[%s3 + $0x198] sm:$0xff] %v329
  %394 = vst [vmem:[%s3 + $0x1a0] sm:$0xff] %v330
  %395 = vst [vmem:[%s3 + $0x1a8] sm:$0xff] %v331
  %396 = vst [vmem:[%s3 + $0x1b0] sm:$0xff] %v332
  %397 = vst [vmem:[%s3 + $0x1b8] sm:$0xff] %v333
  %398 = vst [vmem:[%s3 + $0x1c0] sm:$0xff] %v334
  %399 = vst [vmem:[%s3 + $0x1c8] sm:$0xff] %v335
  %400 = vst [vmem:[%s3 + $0x1d0] sm:$0xff] %v336
  %401 = vst [vmem:[%s3 + $0x1d8] sm:$0xff] %v337
  %402 = vst [vmem:[%s3 + $0x1e0] sm:$0xff] %v338
  %403 = vst [vmem:[%s3 + $0x1e8] sm:$0xff] %v339
  %404 = vst [vmem:[%s3 + $0x1f0] sm:$0xff] %v340
  %405 = vst [vmem:[%s3 + $0x1f8] sm:$0xff] %v341
  // Predicated region
  $region14: #{gen_block_forward.3} parent=0 // pred_check
    _
  $region15: #{gen_block_forward.3} parent=0 // pred_check_branch
    %407 = sbr.rel (0) target = $region17
  $region16: #{gen_block_forward.3} parent=0 // pred_region
    _
  $region17: #{gen_block_forward.3} parent=0 // pred_fallthru
    _
  // Predicated region
  $region18: #{gen_block_forward.3} parent=0 // pred_check
    _
  $region19: #{gen_block_forward.3} parent=0 // pred_check_branch
    %409 = sbr.rel (0) target = $region21
  $region20: #{gen_block_forward.3} parent=0 // pred_region
    _
  $region21: #{gen_block_forward.3} parent=0 // pred_fallthru
    _

</llo_original>
